<compile_context>
chip_gen: v5e
topology: v5e:2x2
jax: 0.10.0
libtpu: 0.0.40
codegen_flags: <defaults>
</compile_context>

<pallas_src>
import functools

import jax
import jax.numpy as jnp
from jax.experimental import pallas as pl
from jax.experimental.pallas import tpu as pltpu

IN_FEATURES = 28 * 28        # 784 (multiple of 8; used as full-extent last dim of x block)
HIDDEN = 512
OUT_FEATURES = 10
OUT_PADDED = 128             # lane-dense output width


def _round_up(n, m):
    return ((n + m - 1) // m) * m


def _cdiv(a, b):
    return -(-a // b)


def _choose_tiles(B, tm_max):
    """Pick (tm_eff, B_pad, n_steps): tm_eff multiple of 8, small padding, >=2 steps if possible."""
    tm_max = max(8, _round_up(tm_max, 8))
    B8 = _round_up(B, 8)
    n = _cdiv(B8, tm_max)
    # Guarantee at least 2 grid steps (when the batch allows it) so the "parallel"
    # batch axis can be sharded across the two v7x TensorCores.
    if n < 2 and B8 >= 16:
        n = 2
    tm_eff = _round_up(_cdiv(B8, n), 8)
    B_pad = n * tm_eff
    return tm_eff, B_pad, n


def mlp_kernel(x_ref, w1_ref, b1_ref, w2_ref, b2_ref, w3_ref, b3_ref, o_ref):
    # x_ref: (tm, 784) f32; weights (in, out) bf16; biases (1, out) f32; o_ref (tm, 128) f32.
    x = x_ref[...].astype(jnp.bfloat16)                       # f32 -> bf16 on the VPU
    h1 = jnp.dot(x, w1_ref[...], preferred_element_type=jnp.float32) + b1_ref[...]
    h1 = jnp.maximum(h1, 0.0)
    h2 = jnp.dot(h1.astype(jnp.bfloat16), w2_ref[...],
                 preferred_element_type=jnp.float32) + b2_ref[...]
    h2 = jnp.maximum(h2, 0.0)
    logits = jnp.dot(h2.astype(jnp.bfloat16), w3_ref[...],
                     preferred_element_type=jnp.float32) + b3_ref[...]
    o_ref[...] = logits.astype(o_ref.dtype)


@functools.partial(jax.jit, static_argnames=("tm",))
def neural_network_forward(x, packed_params, *, tm=512):
    """x: (B, 1, 28, 28) float32 NCHW. Returns logits (B, 10) float32.

    packed_params: output of pack_params() — bf16 weights (784,512)/(512,512)/(512,128),
    f32 biases (1,512)/(1,512)/(1,128).
    """
    w1, b1, w2, b2, w3, b3 = packed_params
    B = x.shape[0]
    x_flat = x.reshape(B, -1)                                 # nn.Flatten()
    assert x_flat.shape[1] == IN_FEATURES

    tm_eff, B_pad, n_steps = _choose_tiles(B, tm)
    x_pad = jnp.pad(x_flat, ((0, B_pad - B), (0, 0)))         # no-op when B_pad == B

    const = lambda shape: pl.BlockSpec(shape, lambda i: (0, 0))   # resident across grid

    out = pl.pallas_call(
        mlp_kernel,
        out_shape=jax.ShapeDtypeStruct((B_pad, OUT_PADDED), jnp.float32),
        grid_spec=pltpu.PrefetchScalarGridSpec(
            num_scalar_prefetch=0,
            grid=(n_steps,),
            in_specs=[
                pl.BlockSpec((tm_eff, IN_FEATURES), lambda i: (i, 0)),  # x tile (f32)
                const((IN_FEATURES, HIDDEN)),                           # W1 (bf16)
                const((1, HIDDEN)),                                     # b1 (f32)
                const((HIDDEN, HIDDEN)),                                # W2 (bf16)
                const((1, HIDDEN)),                                     # b2 (f32)
                const((HIDDEN, OUT_PADDED)),                            # W3 (bf16, padded)
                const((1, OUT_PADDED)),                                 # b3 (f32, padded)
            ],
            out_specs=pl.BlockSpec((tm_eff, OUT_PADDED), lambda i: (i, 0)),
        ),
        compiler_params=pltpu.CompilerParams(
            dimension_semantics=("parallel",),
            vmem_limit_bytes=48 * 1024 * 1024,
        ),
    )(x_pad, w1, b1, w2, b2, w3, b3)

    return out[:B, :OUT_FEATURES]


def init_params(key):
    """Deterministic init mimicking nn.Linear default (uniform +/- 1/sqrt(fan_in)).

    Weights stored transposed vs PyTorch: (in_features, out_features), f32."""
    def linear(key, fan_in, fan_out):
        kw, kb = jax.random.split(key)
        bound = 1.0 / jnp.sqrt(fan_in)
        w = jax.random.uniform(kw, (fan_in, fan_out), jnp.float32, -bound, bound)
        b = jax.random.uniform(kb, (1, fan_out), jnp.float32, -bound, bound)
        return w, b

    k1, k2, k3 = jax.random.split(key, 3)
    w1, b1 = linear(k1, IN_FEATURES, HIDDEN)
    w2, b2 = linear(k2, HIDDEN, HIDDEN)
    w3, b3 = linear(k3, HIDDEN, OUT_FEATURES)
    return (w1, b1, w2, b2, w3, b3)


def pack_params(params):
    """One-time packing: cast weights to bf16, zero-pad W3/b3 columns 10 -> 128."""
    w1, b1, w2, b2, w3, b3 = params
    w3p = jnp.zeros((HIDDEN, OUT_PADDED), jnp.bfloat16)
    w3p = w3p.at[:, :OUT_FEATURES].set(w3.astype(jnp.bfloat16))
    b3p = jnp.zeros((1, OUT_PADDED), jnp.float32)
    b3p = b3p.at[:, :OUT_FEATURES].set(b3)
    return (w1.astype(jnp.bfloat16), b1, w2.astype(jnp.bfloat16), b2, w3p, b3p)


def reference_forward(x, params):
    """Pure-JAX reference with the same numerics as the kernel (bf16 operands, f32 acc).

    Note: bf16 MXU operands mean results differ from a pure-f32 PyTorch forward by ~1e-2."""
    w1, b1, w2, b2, w3, b3 = params
    xf = x.reshape(x.shape[0], -1).astype(jnp.bfloat16)
    h1 = jnp.dot(xf, w1.astype(jnp.bfloat16), preferred_element_type=jnp.float32) + b1
    h1 = jnp.maximum(h1, 0.0)
    h2 = jnp.dot(h1.astype(jnp.bfloat16), w2.astype(jnp.bfloat16),
                 preferred_element_type=jnp.float32) + b2
    h2 = jnp.maximum(h2, 0.0)
    return jnp.dot(h2.astype(jnp.bfloat16), w3.astype(jnp.bfloat16),
                   preferred_element_type=jnp.float32) + b3


if __name__ == "__main__":
    key = jax.random.PRNGKey(0)
    kx, kp = jax.random.split(key)

    B = 64  # small test batch; splits into 2 tiles of 32 rows (exercises the multi-step grid)
    x = jax.random.normal(kx, (B, 1, 28, 28), jnp.float32)  # NCHW like FashionMNIST
    params = init_params(kp)
    packed = pack_params(params)

    logits = neural_network_forward(x, packed)
    logits = jax.block_until_ready(logits)

    ref = reference_forward(x, params)
    assert logits.shape == (B, OUT_FEATURES)
    assert jnp.allclose(logits, ref, atol=1e-2, rtol=1e-2), "mismatch vs reference"

    print("KERNEL_OK")
</pallas_src>

<mosaic_0001>
module attributes {stable_mosaic.version = 11 : i64} {
  func.func @mlp_kernel(%arg0: i32, %arg1: memref<32x784xf32, #tpu.memory_space<vmem>>, %arg2: memref<784x512xbf16, #tpu.memory_space<vmem>>, %arg3: memref<1x512xf32, #tpu.memory_space<vmem>>, %arg4: memref<512x512xbf16, #tpu.memory_space<vmem>>, %arg5: memref<1x512xf32, #tpu.memory_space<vmem>>, %arg6: memref<512x128xbf16, #tpu.memory_space<vmem>>, %arg7: memref<1x128xf32, #tpu.memory_space<vmem>>, %arg8: memref<32x128xf32, #tpu.memory_space<vmem>>) attributes {dimension_semantics = [#tpu.dimension_semantics<parallel>], iteration_bounds = array<i64: 2>, scalar_prefetch = 0 : i64, scratch_operands = 0 : i64, tpu.core_type = #tpu.core_type<tc>, window_params = [{transform_indices = @transform_0, window_bounds = array<i64: 32, 784>}, {pipeline_mode = #tpu.pipeline_mode<synchronous>, transform_indices = @transform_1, window_bounds = array<i64: 784, 512>}, {pipeline_mode = #tpu.pipeline_mode<synchronous>, transform_indices = @transform_2, window_bounds = array<i64: 1, 512>}, {pipeline_mode = #tpu.pipeline_mode<synchronous>, transform_indices = @transform_3, window_bounds = array<i64: 512, 512>}, {pipeline_mode = #tpu.pipeline_mode<synchronous>, transform_indices = @transform_4, window_bounds = array<i64: 1, 512>}, {pipeline_mode = #tpu.pipeline_mode<synchronous>, transform_indices = @transform_5, window_bounds = array<i64: 512, 128>}, {pipeline_mode = #tpu.pipeline_mode<synchronous>, transform_indices = @transform_6, window_bounds = array<i64: 1, 128>}, {transform_indices = @transform_7, window_bounds = array<i64: 32, 128>}]} {
    %c0 = arith.constant 0 : index
    %c0_0 = arith.constant 0 : index
    %0 = vector.load %arg1[%c0, %c0_0] : memref<32x784xf32, #tpu.memory_space<vmem>>, vector<32x784xf32>
    %1 = arith.truncf %0 : vector<32x784xf32> to vector<32x784xbf16>
    %c0_1 = arith.constant 0 : index
    %c0_2 = arith.constant 0 : index
    %2 = vector.load %arg2[%c0_1, %c0_2] : memref<784x512xbf16, #tpu.memory_space<vmem>>, vector<784x512xbf16>
    %cst = arith.constant dense<0.000000e+00> : vector<32x512xf32>
    %3 = tpu.matmul %1, %2, %cst {dimension_numbers = #tpu.dot_dimension_numbers<[1], [0], [0], [1], [0, 0, 1, 1], [], []>} : vector<32x784xbf16>, vector<784x512xbf16>, vector<32x512xf32> -> vector<32x512xf32>
    %c0_3 = arith.constant 0 : index
    %c0_4 = arith.constant 0 : index
    %4 = vector.load %arg3[%c0_3, %c0_4] : memref<1x512xf32, #tpu.memory_space<vmem>>, vector<1x512xf32>
    %5 = vector.broadcast %4 : vector<1x512xf32> to vector<32x512xf32>
    %6 = arith.addf %3, %5 : vector<32x512xf32>
    %cst_5 = arith.constant 0.000000e+00 : f32
    %7 = vector.broadcast %cst_5 : f32 to vector<32x512xf32>
    %8 = arith.maximumf %6, %7 : vector<32x512xf32>
    %9 = arith.truncf %8 : vector<32x512xf32> to vector<32x512xbf16>
    %c0_6 = arith.constant 0 : index
    %c0_7 = arith.constant 0 : index
    %10 = vector.load %arg4[%c0_6, %c0_7] : memref<512x512xbf16, #tpu.memory_space<vmem>>, vector<512x512xbf16>
    %cst_8 = arith.constant dense<0.000000e+00> : vector<32x512xf32>
    %11 = tpu.matmul %9, %10, %cst_8 {dimension_numbers = #tpu.dot_dimension_numbers<[1], [0], [0], [1], [0, 0, 1, 1], [], []>} : vector<32x512xbf16>, vector<512x512xbf16>, vector<32x512xf32> -> vector<32x512xf32>
    %c0_9 = arith.constant 0 : index
    %c0_10 = arith.constant 0 : index
    %12 = vector.load %arg5[%c0_9, %c0_10] : memref<1x512xf32, #tpu.memory_space<vmem>>, vector<1x512xf32>
    %13 = vector.broadcast %12 : vector<1x512xf32> to vector<32x512xf32>
    %14 = arith.addf %11, %13 : vector<32x512xf32>
    %cst_11 = arith.constant 0.000000e+00 : f32
    %15 = vector.broadcast %cst_11 : f32 to vector<32x512xf32>
    %16 = arith.maximumf %14, %15 : vector<32x512xf32>
    %17 = arith.truncf %16 : vector<32x512xf32> to vector<32x512xbf16>
    %c0_12 = arith.constant 0 : index
    %c0_13 = arith.constant 0 : index
    %18 = vector.load %arg6[%c0_12, %c0_13] : memref<512x128xbf16, #tpu.memory_space<vmem>>, vector<512x128xbf16>
    %cst_14 = arith.constant dense<0.000000e+00> : vector<32x128xf32>
    %19 = tpu.matmul %17, %18, %cst_14 {dimension_numbers = #tpu.dot_dimension_numbers<[1], [0], [0], [1], [0, 0, 1, 1], [], []>} : vector<32x512xbf16>, vector<512x128xbf16>, vector<32x128xf32> -> vector<32x128xf32>
    %c0_15 = arith.constant 0 : index
    %c0_16 = arith.constant 0 : index
    %20 = vector.load %arg7[%c0_15, %c0_16] : memref<1x128xf32, #tpu.memory_space<vmem>>, vector<1x128xf32>
    %21 = vector.broadcast %20 : vector<1x128xf32> to vector<32x128xf32>
    %22 = arith.addf %19, %21 : vector<32x128xf32>
    %c0_17 = arith.constant 0 : index
    %c0_18 = arith.constant 0 : index
    %23 = vector.load %arg8[%c0_17, %c0_18] : memref<32x128xf32, #tpu.memory_space<vmem>>, vector<32x128xf32>
    tpu.vector_store %arg8[%c0_17, %c0_18], %22 {strides = array<i32>} : memref<32x128xf32, #tpu.memory_space<vmem>>, vector<32x128xf32>,
    return
  }
  func.func @transform_0(%arg0: i32) -> (i32, i32) {
    %c0_i32 = arith.constant 0 : i32
    %c0_i32_0 = arith.constant 0 : i32
    return %arg0, %c0_i32 : i32, i32
  }
  func.func @transform_1(%arg0: i32) -> (i32, i32) {
    %c0_i32 = arith.constant 0 : i32
    %c0_i32_0 = arith.constant 0 : i32
    %c0_i32_1 = arith.constant 0 : i32
    return %c0_i32, %c0_i32_0 : i32, i32
  }
  func.func @transform_2(%arg0: i32) -> (i32, i32) {
    %c0_i32 = arith.constant 0 : i32
    %c0_i32_0 = arith.constant 0 : i32
    %c0_i32_1 = arith.constant 0 : i32
    return %c0_i32, %c0_i32_0 : i32, i32
  }
  func.func @transform_3(%arg0: i32) -> (i32, i32) {
    %c0_i32 = arith.constant 0 : i32
    %c0_i32_0 = arith.constant 0 : i32
    %c0_i32_1 = arith.constant 0 : i32
    return %c0_i32, %c0_i32_0 : i32, i32
  }
  func.func @transform_4(%arg0: i32) -> (i32, i32) {
    %c0_i32 = arith.constant 0 : i32
    %c0_i32_0 = arith.constant 0 : i32
    %c0_i32_1 = arith.constant 0 : i32
    return %c0_i32, %c0_i32_0 : i32, i32
  }
  func.func @transform_5(%arg0: i32) -> (i32, i32) {
    %c0_i32 = arith.constant 0 : i32
    %c0_i32_0 = arith.constant 0 : i32
    %c0_i32_1 = arith.constant 0 : i32
    return %c0_i32, %c0_i32_0 : i32, i32
  }
  func.func @transform_6(%arg0: i32) -> (i32, i32) {
    %c0_i32 = arith.constant 0 : i32
    %c0_i32_0 = arith.constant 0 : i32
    %c0_i32_1 = arith.constant 0 : i32
    return %c0_i32, %c0_i32_0 : i32, i32
  }
  func.func @transform_7(%arg0: i32) -> (i32, i32) {
    %c0_i32 = arith.constant 0 : i32
    %c0_i32_0 = arith.constant 0 : i32
    return %arg0, %c0_i32 : i32, i32
  }
}

</mosaic_0001>

<llo_original>
// kernel: neural_network_forward.1
$region0: #{neural_network_forward.1}
  #allocation0 [shape = 'u32[]', space=smem, size = 0x4, offset = 0x4, fixed_abs, tag = 'smem constant byte address 0x4 - core index']
  #allocation1 [shape = 'u32[72,128]{1,0:T(1,128)}', space=vmem, size = 0x9000, scoped, tag = 'internal scratch']
  %s0 = inlined_call_operand.vmem [shape: f32[64,784], index: 0, kind: input, shape index: {}]
  %s1 = inlined_call_operand.hbm [shape: bf16[784,512], index: 1, kind: input, shape index: {}]
  %s2 = inlined_call_operand.vmem [shape: f32[1,512], index: 2, kind: input, shape index: {}]
  %s3 = inlined_call_operand.vmem [shape: bf16[512,512], index: 3, kind: input, shape index: {}]
  %s4 = inlined_call_operand.vmem [shape: f32[1,512], index: 4, kind: input, shape index: {}]
  %s5 = inlined_call_operand.hbm [shape: bf16[512,128], index: 5, kind: input, shape index: {}]
  %s6 = inlined_call_operand.vmem [shape: f32[1,128], index: 6, kind: input, shape index: {}]
  %s7 = inlined_call_operand.vmem [shape: f32[64,128], index: 7, kind: output, shape index: {}]
  %s8 = sld [smem:[#allocation0]]
  $region69: #{neural_network_forward.1} parent=0
    _
  %s10 = ssub.s32 1, %s8
  %s11 = scalar_select 0, %s10, %s8
  $region1: #{neural_network_forward.1} parent=0
    #allocation2 [shape = 'u8[802816]{0}', space=vmem, size = 0xc4000, scoped, tag = 'input window, operand 1, single buffered']
    #allocation3 [shape = 's32[2]{0}', space=sflag, size = 0x8, scoped, tag = 'scoped memory for neural_network_forward.1']
    #allocation4 [shape = 'u8[131072]{0}', space=vmem, size = 0x20000, scoped, tag = 'input window, operand 5, single buffered']
    #allocation5 [shape = 's32[1]{0}', space=sflag, size = 0x4, scoped, tag = 'scoped memory for neural_network_forward.1']
    %12 = vsyncpa [#allocation3], 0
    %13 = vsyncpa [#allocation5], 0
    loop: start=0, step=1, limit=4
    $region2: #{neural_network_forward.1} parent=1 // loop_pre_header
      _
    $region3: #{neural_network_forward.1} parent=1 // loop_header
      %s15 = sphi 0, %s19
      %p16 = scmp.ge.s32.totalorder %s15, 4
      %s25 = sphi 0, %s27
      %s28 = sphi 0, %s25
      %s29 = sphi 0, %s28
      %s45 = sphi 0, %s29
      %s49 = sphi 0, %s49
      %s51 = sphi 0, %s49
      %s52 = sphi 0, %s51
      %s66 = sphi 0, %s52
      %s70 = sphi 0, %s70
      %s72 = sphi 0, %s70
      %s73 = sphi 0, %s72
      %s87 = sphi 0, %s73
      %s91 = sphi 0, %s91
      %s93 = sphi 0, %s91
      %s94 = sphi 0, %s93
      %s108 = sphi 0, %s94
      %s112 = sphi 0, %s112
      %s114 = sphi 0, %s112
      %s115 = sphi 0, %s114
      %s129 = sphi 0, %s115
      %s133 = sphi 0, %s133
      %s135 = sphi 0, %s133
      %s136 = sphi 0, %s135
      %s150 = sphi 0, %s136
      %s154 = sphi 0, %s154
      %s156 = sphi 0, %s154
      %s157 = sphi 0, %s156
      %s171 = sphi 0, %s157
      %s177 = sphi 0, %s179
      %s180 = sphi 0, %s177
      %s181 = sphi 0, %s180
      %s197 = sphi 0, %s181
    $region4: #{neural_network_forward.1} parent=1 // loop_header_branch
      %18 = sbr.rel (%p16) target = $region8
    $region5: #{neural_network_forward.1} parent=1 // loop_body
      %s20 = ssub.s32 %s15, 1
      %s21 = ssub.s32 %s15, 2
      %s22 = sadd.s32 %s15, 1
      %s23 = ssub.s32 %s15, %s22
      %p24 = scmp.eq.s32.totalorder %s23, 0
      %s26 = sadd.s32 %s25, 1
      %s27 = scalar_select %p24, %s25, %s26
      %p30 = pneg %p24
      %p31 = scmp.eq.s32.totalorder %s15, 1
      %p32 = por %p30, %p31
      %p33 = scmp.ne.s32.totalorder %s25, %s28
      %p34 = scmp.eq.s32.totalorder %s15, 0
      %p35 = por %p33, %p34
      %p36 = scmp.ne.s32.totalorder %s25, %s28
      %p37 = scmp.eq.s32.totalorder %s20, 1
      %p38 = por %p36, %p37
      %p39 = scmp.ne.s32.totalorder %s28, %s29
      %p40 = scmp.eq.s32.totalorder %s20, 0
      %p41 = por %p39, %p40
      %p42 = scmp.ne.s32.totalorder %s28, %s29
      %p43 = scmp.eq.s32.totalorder %s21, 1
      %p44 = por %p42, %p43
      %p46 = scmp.ne.s32.totalorder %s29, %s45
      %p47 = scmp.eq.s32.totalorder %s21, 0
      %p48 = por %p46, %p47
      %s50 = sadd.s32 %s49, 1
      %p53 = scmp.eq.s32.totalorder %s15, 1
      %p54 = scmp.ne.s32.totalorder %s49, %s51
      %p55 = scmp.eq.s32.totalorder %s15, 0
      %p56 = por %p54, %p55
      %p57 = scmp.ne.s32.totalorder %s49, %s51
      %p58 = scmp.eq.s32.totalorder %s20, 1
      %p59 = por %p57, %p58
      %p60 = scmp.ne.s32.totalorder %s51, %s52
      %p61 = scmp.eq.s32.totalorder %s20, 0
      %p62 = por %p60, %p61
      %p63 = scmp.ne.s32.totalorder %s51, %s52
      %p64 = scmp.eq.s32.totalorder %s21, 1
      %p65 = por %p63, %p64
      %p67 = scmp.ne.s32.totalorder %s52, %s66
      %p68 = scmp.eq.s32.totalorder %s21, 0
      %p69 = por %p67, %p68
      %s71 = sadd.s32 %s70, 1
      %p74 = scmp.eq.s32.totalorder %s15, 1
      %p75 = scmp.ne.s32.totalorder %s70, %s72
      %p76 = scmp.eq.s32.totalorder %s15, 0
      %p77 = por %p75, %p76
      %p78 = scmp.ne.s32.totalorder %s70, %s72
      %p79 = scmp.eq.s32.totalorder %s20, 1
      %p80 = por %p78, %p79
      %p81 = scmp.ne.s32.totalorder %s72, %s73
      %p82 = scmp.eq.s32.totalorder %s20, 0
      %p83 = por %p81, %p82
      %p84 = scmp.ne.s32.totalorder %s72, %s73
      %p85 = scmp.eq.s32.totalorder %s21, 1
      %p86 = por %p84, %p85
      %p88 = scmp.ne.s32.totalorder %s73, %s87
      %p89 = scmp.eq.s32.totalorder %s21, 0
      %p90 = por %p88, %p89
      %s92 = sadd.s32 %s91, 1
      %p95 = scmp.eq.s32.totalorder %s15, 1
      %p96 = scmp.ne.s32.totalorder %s91, %s93
      %p97 = scmp.eq.s32.totalorder %s15, 0
      %p98 = por %p96, %p97
      %p99 = scmp.ne.s32.totalorder %s91, %s93
      %p100 = scmp.eq.s32.totalorder %s20, 1
      %p101 = por %p99, %p100
      %p102 = scmp.ne.s32.totalorder %s93, %s94
      %p103 = scmp.eq.s32.totalorder %s20, 0
      %p104 = por %p102, %p103
      %p105 = scmp.ne.s32.totalorder %s93, %s94
      %p106 = scmp.eq.s32.totalorder %s21, 1
      %p107 = por %p105, %p106
      %p109 = scmp.ne.s32.totalorder %s94, %s108
      %p110 = scmp.eq.s32.totalorder %s21, 0
      %p111 = por %p109, %p110
      %s113 = sadd.s32 %s112, 1
      %p116 = scmp.eq.s32.totalorder %s15, 1
      %p117 = scmp.ne.s32.totalorder %s112, %s114
      %p118 = scmp.eq.s32.totalorder %s15, 0
      %p119 = por %p117, %p118
      %p120 = scmp.ne.s32.totalorder %s112, %s114
      %p121 = scmp.eq.s32.totalorder %s20, 1
      %p122 = por %p120, %p121
      %p123 = scmp.ne.s32.totalorder %s114, %s115
      %p124 = scmp.eq.s32.totalorder %s20, 0
      %p125 = por %p123, %p124
      %p126 = scmp.ne.s32.totalorder %s114, %s115
      %p127 = scmp.eq.s32.totalorder %s21, 1
      %p128 = por %p126, %p127
      %p130 = scmp.ne.s32.totalorder %s115, %s129
      %p131 = scmp.eq.s32.totalorder %s21, 0
      %p132 = por %p130, %p131
      %s134 = sadd.s32 %s133, 1
      %p137 = scmp.eq.s32.totalorder %s15, 1
      %p138 = scmp.ne.s32.totalorder %s133, %s135
      %p139 = scmp.eq.s32.totalorder %s15, 0
      %p140 = por %p138, %p139
      %p141 = scmp.ne.s32.totalorder %s133, %s135
      %p142 = scmp.eq.s32.totalorder %s20, 1
      %p143 = por %p141, %p142
      %p144 = scmp.ne.s32.totalorder %s135, %s136
      %p145 = scmp.eq.s32.totalorder %s20, 0
      %p146 = por %p144, %p145
      %p147 = scmp.ne.s32.totalorder %s135, %s136
      %p148 = scmp.eq.s32.totalorder %s21, 1
      %p149 = por %p147, %p148
      %p151 = scmp.ne.s32.totalorder %s136, %s150
      %p152 = scmp.eq.s32.totalorder %s21, 0
      %p153 = por %p151, %p152
      %s155 = sadd.s32 %s154, 1
      %p158 = scmp.eq.s32.totalorder %s15, 1
      %p159 = scmp.ne.s32.totalorder %s154, %s156
      %p160 = scmp.eq.s32.totalorder %s15, 0
      %p161 = por %p159, %p160
      %p162 = scmp.ne.s32.totalorder %s154, %s156
      %p163 = scmp.eq.s32.totalorder %s20, 1
      %p164 = por %p162, %p163
      %p165 = scmp.ne.s32.totalorder %s156, %s157
      %p166 = scmp.eq.s32.totalorder %s20, 0
      %p167 = por %p165, %p166
      %p168 = scmp.ne.s32.totalorder %s156, %s157
      %p169 = scmp.eq.s32.totalorder %s21, 1
      %p170 = por %p168, %p169
      %p172 = scmp.ne.s32.totalorder %s157, %s171
      %p173 = scmp.eq.s32.totalorder %s21, 0
      %p174 = por %p172, %p173
      %s175 = ssub.s32 %s15, %s22
      %p176 = scmp.eq.s32.totalorder %s175, 0
      %s178 = sadd.s32 %s177, 1
      %s179 = scalar_select %p176, %s177, %s178
      %p182 = pneg %p176
      %p183 = scmp.eq.s32.totalorder %s15, 1
      %p184 = por %p182, %p183
      %p185 = scmp.ne.s32.totalorder %s177, %s180
      %p186 = scmp.eq.s32.totalorder %s15, 0
      %p187 = por %p185, %p186
      %p188 = scmp.ne.s32.totalorder %s177, %s180
      %p189 = scmp.eq.s32.totalorder %s20, 1
      %p190 = por %p188, %p189
      %p191 = scmp.ne.s32.totalorder %s180, %s181
      %p192 = scmp.eq.s32.totalorder %s20, 0
      %p193 = por %p191, %p192
      %p194 = scmp.ne.s32.totalorder %s180, %s181
      %p195 = scmp.eq.s32.totalorder %s21, 1
      %p196 = por %p194, %p195
      %p198 = scmp.ne.s32.totalorder %s181, %s197
      %p199 = scmp.eq.s32.totalorder %s21, 0
      %p200 = por %p198, %p199
      %p201 = scmp.le.s32.totalorder 1, %s15
      %p202 = scmp.lt.s32.totalorder %s15, 3
      %p203 = pnand %p201, %p202
      %p204 = pneg %p203
      // Predicated region
      $region9: #{neural_network_forward.1} parent=5 // pred_check
        _
      $region10: #{neural_network_forward.1} parent=5 // pred_check_branch
        %206 = sbr.rel (%p203) target = $region12
      $region11: #{neural_network_forward.1} parent=5 // pred_region
        %s207 = ssub.s32 %s15, 1
        // Predicated region
        $region13: #{neural_network_forward.1} parent=11 // pred_check
          %p208 = pneg %p62
        $region14: #{neural_network_forward.1} parent=11 // pred_check_branch
          %210 = sbr.rel (%p208) target = $region16
        $region15: #{neural_network_forward.1} parent=11 // pred_region
          %212 = vsyncadd [#allocation3], 0
          %s213 = sshll.u32 %s1, 4
          %s214 = int_to_ptr.hbm [resolvable:$true] %s213
          %s215 = sshll.u32 [#allocation2], 4
          %s216 = int_to_ptr.vmem [resolvable:$true] %s215
          %221 = dma.hbm_to_vmem [thread:$0]  %s214, 25088, %s216, [#allocation3], 256, 256, 16
        $region16: #{neural_network_forward.1} parent=11 // pred_fallthru
          _
        // Predicated region
        $region17: #{neural_network_forward.1} parent=11 // pred_check
          %p222 = pneg %p83
        $region18: #{neural_network_forward.1} parent=11 // pred_check_branch
          %224 = sbr.rel (%p222) target = $region20
        $region19: #{neural_network_forward.1} parent=11 // pred_region
          _
        $region20: #{neural_network_forward.1} parent=11 // pred_fallthru
          _
        // Predicated region
        $region21: #{neural_network_forward.1} parent=11 // pred_check
          %p225 = pneg %p104
        $region22: #{neural_network_forward.1} parent=11 // pred_check_branch
          %227 = sbr.rel (%p225) target = $region24
        $region23: #{neural_network_forward.1} parent=11 // pred_region
          _
        $region24: #{neural_network_forward.1} parent=11 // pred_fallthru
          _
        // Predicated region
        $region25: #{neural_network_forward.1} parent=11 // pred_check
          %p228 = pneg %p125
        $region26: #{neural_network_forward.1} parent=11 // pred_check_branch
          %230 = sbr.rel (%p228) target = $region28
        $region27: #{neural_network_forward.1} parent=11 // pred_region
          _
        $region28: #{neural_network_forward.1} parent=11 // pred_fallthru
          _
        // Predicated region
        $region29: #{neural_network_forward.1} parent=11 // pred_check
          %p231 = pneg %p146
        $region30: #{neural_network_forward.1} parent=11 // pred_check_branch
          %233 = sbr.rel (%p231) target = $region32
        $region31: #{neural_network_forward.1} parent=11 // pred_region
          %235 = vsyncadd [#allocation5], 0
          %s236 = sshll.u32 %s5, 4
          %s237 = int_to_ptr.hbm [resolvable:$true] %s236
          %s238 = sshll.u32 [#allocation4], 4
          %s239 = int_to_ptr.vmem [resolvable:$true] %s238
          %244 = dma.hbm_to_vmem [thread:$0]  %s237, 4096, %s239, [#allocation5], 64, 64, 4
        $region32: #{neural_network_forward.1} parent=11 // pred_fallthru
          _
        // Predicated region
        $region33: #{neural_network_forward.1} parent=11 // pred_check
          %p245 = pneg %p167
        $region34: #{neural_network_forward.1} parent=11 // pred_check_branch
          %247 = sbr.rel (%p245) target = $region36
        $region35: #{neural_network_forward.1} parent=11 // pred_region
          _
        $region36: #{neural_network_forward.1} parent=11 // pred_fallthru
          _
      $region12: #{neural_network_forward.1} parent=5 // pred_fallthru
        _
      %p248 = scmp.lt.s32.totalorder %s15, 2
      // Predicated region
      $region37: #{neural_network_forward.1} parent=5 // pred_check
        %p249 = pneg %p248
      $region38: #{neural_network_forward.1} parent=5 // pred_check_branch
        %251 = sbr.rel (%p249) target = $region40
      $region39: #{neural_network_forward.1} parent=5 // pred_region
        // Predicated region
        $region41: #{neural_network_forward.1} parent=39 // pred_check
          %p252 = pneg %p35
        $region42: #{neural_network_forward.1} parent=39 // pred_check_branch
          %254 = sbr.rel (%p252) target = $region44
        $region43: #{neural_network_forward.1} parent=39 // pred_region
          %s255 = smul.u32 4, %s15
          %p256 = scmp.lt.s32.totalorder %s255, 7
          %s257 = scalar_select %p256, %s255, 7
          %s258 = smul.addr %s257, 7
          %s259 = smul.addr %s258, 8
          %s260 = scalar_lea.vmem %s0, %s259
          %s261 = smul.u32 4, %s15
        $region44: #{neural_network_forward.1} parent=39 // pred_fallthru
          _
      $region40: #{neural_network_forward.1} parent=5 // pred_fallthru
        _
      %p262 = scmp.le.s32.totalorder 1, %s15
      %p263 = scmp.lt.s32.totalorder %s15, 3
      %p264 = pnand %p262, %p263
      %p265 = pneg %p264
      // Predicated region
      $region45: #{neural_network_forward.1} parent=5 // pred_check
        _
      $region46: #{neural_network_forward.1} parent=5 // pred_check_branch
        %267 = sbr.rel (%p264) target = $region48
      $region47: #{neural_network_forward.1} parent=5 // pred_region
        %s268 = ssub.s32 %s15, 1
        // Predicated region
        $region49: #{neural_network_forward.1} parent=47 // pred_check
          %p269 = pneg %p62
        $region50: #{neural_network_forward.1} parent=47 // pred_check_branch
          %271 = sbr.rel (%p269) target = $region52
        $region51: #{neural_network_forward.1} parent=47 // pred_region
          %273 = dma.done [#allocation3], 25088
        $region52: #{neural_network_forward.1} parent=47 // pred_fallthru
          _
        // Predicated region
        $region53: #{neural_network_forward.1} parent=47 // pred_check
          %p274 = pneg %p146
        $region54: #{neural_network_forward.1} parent=47 // pred_check_branch
          %276 = sbr.rel (%p274) target = $region56
        $region55: #{neural_network_forward.1} parent=47 // pred_region
          %278 = dma.done [#allocation5], 4096
        $region56: #{neural_network_forward.1} parent=47 // pred_fallthru
          _
        %s279 = smul.u32 4, %s20
        %p280 = scmp.lt.s32.totalorder %s279, 7
        %s281 = scalar_select %p280, %s279, 7
        %s282 = smul.addr %s281, 7
        %s283 = smul.addr %s282, 8
        %s284 = scalar_lea.vmem %s0, %s283
        %p285 = pneg %p41
        %p286 = pneg %p38
        %p287 = pneg %p62
        %p288 = pneg %p59
        %p289 = pneg %p83
        %p290 = pneg %p80
        %p291 = pneg %p104
        %p292 = pneg %p101
        %p293 = pneg %p125
        %p294 = pneg %p122
        %p295 = pneg %p146
        %p296 = pneg %p143
        %p297 = pneg %p167
        %p298 = pneg %p164
        %p299 = pneg %p193
        %p300 = pneg %p190
        %s301 = smul.u32 4, %s20
        %p302 = scmp.lt.s32.totalorder %s301, 7
        %s303 = scalar_select %p302, %s301, 7
        %s304 = smul.addr %s303, 8
        %s305 = scalar_lea.vmem %s7, %s304
        %s306 = smul.u32 4, %s20
        %p307 = scmp.lt.s32.totalorder %s306, 7
        %s308 = scalar_select %p307, %s306, 7
        %s309 = smul.addr %s308, 7
        %s310 = smul.addr %s309, 8
        %s311 = scalar_lea.vmem %s0, %s310
        %s312 = smul.u32 4, %s20
        %s313 = smul.u32 4, %s20
        %p314 = scmp.lt.s32.totalorder %s313, 7
        %s315 = scalar_select %p314, %s313, 7
        %s316 = smul.addr %s315, 8
        %s317 = scalar_lea.vmem %s7, %s316
        %s318 = smul.u32 4, %s20
        %v320 = vld [vmem:[%s311] sm:$0xff]
        %v321 = vld [vmem:[%s311 + $0x8] sm:$0xff]
        %v322 = vld [vmem:[%s311 + $0x10] sm:$0xff]
        %v323 = vld [vmem:[%s311 + $0x18] sm:$0xff]
        %v324 = vld [vmem:[%s311 + $0x20] sm:$0xff]
        %v325 = vld [vmem:[%s311 + $0x28] sm:$0xff]
        %v326 = vld [vmem:[%s311 + $0x30] sm:$0xff]
        %v327 = vld [vmem:[%s311 + $0x38] sm:$0xff]
        %v328 = vld [vmem:[%s311 + $0x40] sm:$0xff]
        %v329 = vld [vmem:[%s311 + $0x48] sm:$0xff]
        %v330 = vld [vmem:[%s311 + $0x50] sm:$0xff]
        %v331 = vld [vmem:[%s311 + $0x58] sm:$0xff]
        %v332 = vld [vmem:[%s311 + $0x60] sm:$0xff]
        %v333 = vld [vmem:[%s311 + $0x68] sm:$0xff]
        %v334 = vld [vmem:[%s311 + $0x70] sm:$0xff]
        %v335 = vld [vmem:[%s311 + $0x78] sm:$0xff]
        %v336 = vld [vmem:[%s311 + $0x80] sm:$0xff]
        %v337 = vld [vmem:[%s311 + $0x88] sm:$0xff]
        %v338 = vld [vmem:[%s311 + $0x90] sm:$0xff]
        %v339 = vld [vmem:[%s311 + $0x98] sm:$0xff]
        %v340 = vld [vmem:[%s311 + $0xa0] sm:$0xff]
        %v341 = vld [vmem:[%s311 + $0xa8] sm:$0xff]
        %v342 = vld [vmem:[%s311 + $0xb0] sm:$0xff]
        %v343 = vld [vmem:[%s311 + $0xb8] sm:$0xff]
        %v344 = vld [vmem:[%s311 + $0xc0] sm:$0xff]
        %v345 = vld [vmem:[%s311 + $0xc8] sm:$0xff]
        %v346 = vld [vmem:[%s311 + $0xd0] sm:$0xff]
        %v347 = vld [vmem:[%s311 + $0xd8] sm:$0xff]
        %v348 = vpack.c.bf16 %v327, %v320
        %v349 = vpack.c.bf16 %v328, %v321
        %v350 = vpack.c.bf16 %v329, %v322
        %v351 = vpack.c.bf16 %v330, %v323
        %v352 = vpack.c.bf16 %v331, %v324
        %v353 = vpack.c.bf16 %v332, %v325
        %v354 = vpack.c.bf16 %v333, %v326
        %v355 = vpack.c.bf16 %v341, %v334
        %v356 = vpack.c.bf16 %v342, %v335
        %v357 = vpack.c.bf16 %v343, %v336
        %v358 = vpack.c.bf16 %v344, %v337
        %v359 = vpack.c.bf16 %v345, %v338
        %v360 = vpack.c.bf16 %v346, %v339
        %v361 = vpack.c.bf16 %v347, %v340
        %v362 = vld [vmem:[#allocation2] sm:$0xff]
        %v363 = vld [vmem:[#allocation2 + $0x8] sm:$0xff]
        %v364 = vld [vmem:[#allocation2 + $0x10] sm:$0xff]
        %v365 = vld [vmem:[#allocation2 + $0x18] sm:$0xff]
        %v366 = vld [vmem:[#allocation2 + $0x20] sm:$0xff]
        %v367 = vld [vmem:[#allocation2 + $0x28] sm:$0xff]
        %v368 = vld [vmem:[#allocation2 + $0x30] sm:$0xff]
        %v369 = vld [vmem:[#allocation2 + $0x38] sm:$0xff]
        %v370 = vld [vmem:[#allocation2 + $0x40] sm:$0xff]
        %v371 = vld [vmem:[#allocation2 + $0x48] sm:$0xff]
        %v372 = vld [vmem:[#allocation2 + $0x50] sm:$0xff]
        %v373 = vld [vmem:[#allocation2 + $0x58] sm:$0xff]
        %v374 = vld [vmem:[#allocation2 + $0x60] sm:$0xff]
        %v375 = vld [vmem:[#allocation2 + $0x68] sm:$0xff]
        %v376 = vld [vmem:[#allocation2 + $0x70] sm:$0xff]
        %v377 = vld [vmem:[#allocation2 + $0x78] sm:$0xff]
        %v378 = vld [vmem:[#allocation2 + $0x80] sm:$0xff]
        %v379 = vld [vmem:[#allocation2 + $0x88] sm:$0xff]
        %v380 = vld [vmem:[#allocation2 + $0x90] sm:$0xff]
        %v381 = vld [vmem:[#allocation2 + $0x98] sm:$0xff]
        %v382 = vld [vmem:[#allocation2 + $0xa0] sm:$0xff]
        %v383 = vld [vmem:[#allocation2 + $0xa8] sm:$0xff]
        %v384 = vld [vmem:[#allocation2 + $0xb0] sm:$0xff]
        %v385 = vld [vmem:[#allocation2 + $0xb8] sm:$0xff]
        %v386 = vld [vmem:[#allocation2 + $0xc0] sm:$0xff]
        %v387 = vld [vmem:[#allocation2 + $0xc8] sm:$0xff]
        %v388 = vld [vmem:[#allocation2 + $0xd0] sm:$0xff]
        %v389 = vld [vmem:[#allocation2 + $0xd8] sm:$0xff]
        %v390 = vld [vmem:[#allocation2 + $0xe0] sm:$0xff]
        %v391 = vld [vmem:[#allocation2 + $0xe8] sm:$0xff]
        %v392 = vld [vmem:[#allocation2 + $0xf0] sm:$0xff]
        %v393 = vld [vmem:[#allocation2 + $0xf8] sm:$0xff]
        %v394 = vld [vmem:[#allocation2 + $0x100] sm:$0xff]
        %v395 = vld [vmem:[#allocation2 + $0x108] sm:$0xff]
        %v396 = vld [vmem:[#allocation2 + $0x110] sm:$0xff]
        %v397 = vld [vmem:[#allocation2 + $0x118] sm:$0xff]
        %v398 = vld [vmem:[#allocation2 + $0x120] sm:$0xff]
        %v399 = vld [vmem:[#allocation2 + $0x128] sm:$0xff]
        %v400 = vld [vmem:[#allocation2 + $0x130] sm:$0xff]
        %v401 = vld [vmem:[#allocation2 + $0x138] sm:$0xff]
        %v402 = vld [vmem:[#allocation2 + $0x140] sm:$0xff]
        %v403 = vld [vmem:[#allocation2 + $0x148] sm:$0xff]
        %v404 = vld [vmem:[#allocation2 + $0x150] sm:$0xff]
        %v405 = vld [vmem:[#allocation2 + $0x158] sm:$0xff]
        %v406 = vld [vmem:[#allocation2 + $0x160] sm:$0xff]
        %v407 = vld [vmem:[#allocation2 + $0x168] sm:$0xff]
        %v408 = vld [vmem:[#allocation2 + $0x170] sm:$0xff]
        %v409 = vld [vmem:[#allocation2 + $0x178] sm:$0xff]
        %v410 = vld [vmem:[#allocation2 + $0x180] sm:$0xff]
        %v411 = vld [vmem:[#allocation2 + $0x188] sm:$0xff]
        %v412 = vld [vmem:[#allocation2 + $0x190] sm:$0xff]
        %v413 = vld [vmem:[#allocation2 + $0x198] sm:$0xff]
        %v414 = vld [vmem:[#allocation2 + $0x1a0] sm:$0xff]
        %v415 = vld [vmem:[#allocation2 + $0x1a8] sm:$0xff]
        %v416 = vld [vmem:[#allocation2 + $0x1b0] sm:$0xff]
        %v417 = vld [vmem:[#allocation2 + $0x1b8] sm:$0xff]
        %v418 = vld [vmem:[#allocation2 + $0x1c0] sm:$0xff]
        %v419 = vld [vmem:[#allocation2 + $0x1c8] sm:$0xff]
        %v420 = vld [vmem:[#allocation2 + $0x1d0] sm:$0xff]
        %v421 = vld [vmem:[#allocation2 + $0x1d8] sm:$0xff]
        %v422 = vld [vmem:[#allocation2 + $0x1e0] sm:$0xff]
        %v423 = vld [vmem:[#allocation2 + $0x1e8] sm:$0xff]
        %v424 = vld [vmem:[#allocation2 + $0x1f0] sm:$0xff]
        %v425 = vld [vmem:[#allocation2 + $0x1f8] sm:$0xff]
        %v426 = vld [vmem:[#allocation2 + $0x200] sm:$0xff]
        %v427 = vld [vmem:[#allocation2 + $0x208] sm:$0xff]
        %v428 = vld [vmem:[#allocation2 + $0x210] sm:$0xff]
        %v429 = vld [vmem:[#allocation2 + $0x218] sm:$0xff]
        %v430 = vld [vmem:[#allocation2 + $0x220] sm:$0xff]
        %v431 = vld [vmem:[#allocation2 + $0x228] sm:$0xff]
        %v432 = vld [vmem:[#allocation2 + $0x230] sm:$0xff]
        %v433 = vld [vmem:[#allocation2 + $0x238] sm:$0xff]
        %v434 = vld [vmem:[#allocation2 + $0x240] sm:$0xff]
        %v435 = vld [vmem:[#allocation2 + $0x248] sm:$0xff]
        %v436 = vld [vmem:[#allocation2 + $0x250] sm:$0xff]
        %v437 = vld [vmem:[#allocation2 + $0x258] sm:$0xff]
        %v438 = vld [vmem:[#allocation2 + $0x260] sm:$0xff]
        %v439 = vld [vmem:[#allocation2 + $0x268] sm:$0xff]
        %v440 = vld [vmem:[#allocation2 + $0x270] sm:$0xff]
        %v441 = vld [vmem:[#allocation2 + $0x278] sm:$0xff]
        %v442 = vld [vmem:[#allocation2 + $0x280] sm:$0xff]
        %v443 = vld [vmem:[#allocation2 + $0x288] sm:$0xff]
        %v444 = vld [vmem:[#allocation2 + $0x290] sm:$0xff]
        %v445 = vld [vmem:[#allocation2 + $0x298] sm:$0xff]
        %v446 = vld [vmem:[#allocation2 + $0x2a0] sm:$0xff]
        %v447 = vld [vmem:[#allocation2 + $0x2a8] sm:$0xff]
        %v448 = vld [vmem:[#allocation2 + $0x2b0] sm:$0xff]
        %v449 = vld [vmem:[#allocation2 + $0x2b8] sm:$0xff]
        %v450 = vld [vmem:[#allocation2 + $0x2c0] sm:$0xff]
        %v451 = vld [vmem:[#allocation2 + $0x2c8] sm:$0xff]
        %v452 = vld [vmem:[#allocation2 + $0x2d0] sm:$0xff]
        %v453 = vld [vmem:[#allocation2 + $0x2d8] sm:$0xff]
        %v454 = vld [vmem:[#allocation2 + $0x2e0] sm:$0xff]
        %v455 = vld [vmem:[#allocation2 + $0x2e8] sm:$0xff]
        %v456 = vld [vmem:[#allocation2 + $0x2f0] sm:$0xff]
        %v457 = vld [vmem:[#allocation2 + $0x2f8] sm:$0xff]
        %v458 = vld [vmem:[#allocation2 + $0x300] sm:$0xff]
        %v459 = vld [vmem:[#allocation2 + $0x308] sm:$0xff]
        %v460 = vld [vmem:[#allocation2 + $0x310] sm:$0xff]
        %v461 = vld [vmem:[#allocation2 + $0x318] sm:$0xff]
        %v462 = vld [vmem:[#allocation2 + $0x320] sm:$0xff]
        %v463 = vld [vmem:[#allocation2 + $0x328] sm:$0xff]
        %v464 = vld [vmem:[#allocation2 + $0x330] sm:$0xff]
        %v465 = vld [vmem:[#allocation2 + $0x338] sm:$0xff]
        %v466 = vld [vmem:[#allocation2 + $0x340] sm:$0xff]
        %v467 = vld [vmem:[#allocation2 + $0x348] sm:$0xff]
        %v468 = vld [vmem:[#allocation2 + $0x350] sm:$0xff]
        %v469 = vld [vmem:[#allocation2 + $0x358] sm:$0xff]
        %v470 = vld [vmem:[#allocation2 + $0x360] sm:$0xff]
        %v471 = vld [vmem:[#allocation2 + $0x368] sm:$0xff]
        %v472 = vld [vmem:[#allocation2 + $0x370] sm:$0xff]
        %v473 = vld [vmem:[#allocation2 + $0x378] sm:$0xff]
        %v474 = vld [vmem:[#allocation2 + $0x380] sm:$0xff]
        %v475 = vld [vmem:[#allocation2 + $0x388] sm:$0xff]
        %v476 = vld [vmem:[#allocation2 + $0x390] sm:$0xff]
        %v477 = vld [vmem:[#allocation2 + $0x398] sm:$0xff]
        %v478 = vld [vmem:[#allocation2 + $0x3a0] sm:$0xff]
        %v479 = vld [vmem:[#allocation2 + $0x3a8] sm:$0xff]
        %v480 = vld [vmem:[#allocation2 + $0x3b0] sm:$0xff]
        %v481 = vld [vmem:[#allocation2 + $0x3b8] sm:$0xff]
        %v482 = vld [vmem:[#allocation2 + $0x3c0] sm:$0xff]
        %v483 = vld [vmem:[#allocation2 + $0x3c8] sm:$0xff]
        %v484 = vld [vmem:[#allocation2 + $0x3d0] sm:$0xff]
        %v485 = vld [vmem:[#allocation2 + $0x3d8] sm:$0xff]
        %v486 = vld [vmem:[#allocation2 + $0x3e0] sm:$0xff]
        %v487 = vld [vmem:[#allocation2 + $0x3e8] sm:$0xff]
        %v488 = vld [vmem:[#allocation2 + $0x3f0] sm:$0xff]
        %v489 = vld [vmem:[#allocation2 + $0x3f8] sm:$0xff]
        %v490 = vld [vmem:[#allocation2 + $0x400] sm:$0xff]
        %v491 = vld [vmem:[#allocation2 + $0x408] sm:$0xff]
        %v492 = vld [vmem:[#allocation2 + $0x410] sm:$0xff]
        %v493 = vld [vmem:[#allocation2 + $0x418] sm:$0xff]
        %v494 = vld [vmem:[#allocation2 + $0x420] sm:$0xff]
        %v495 = vld [vmem:[#allocation2 + $0x428] sm:$0xff]
        %v496 = vld [vmem:[#allocation2 + $0x430] sm:$0xff]
        %v497 = vld [vmem:[#allocation2 + $0x438] sm:$0xff]
        %v498 = vld [vmem:[#allocation2 + $0x440] sm:$0xff]
        %v499 = vld [vmem:[#allocation2 + $0x448] sm:$0xff]
        %v500 = vld [vmem:[#allocation2 + $0x450] sm:$0xff]
        %v501 = vld [vmem:[#allocation2 + $0x458] sm:$0xff]
        %v502 = vld [vmem:[#allocation2 + $0x460] sm:$0xff]
        %v503 = vld [vmem:[#allocation2 + $0x468] sm:$0xff]
        %v504 = vld [vmem:[#allocation2 + $0x470] sm:$0xff]
        %v505 = vld [vmem:[#allocation2 + $0x478] sm:$0xff]
        %v506 = vld [vmem:[#allocation2 + $0x480] sm:$0xff]
        %v507 = vld [vmem:[#allocation2 + $0x488] sm:$0xff]
        %v508 = vld [vmem:[#allocation2 + $0x490] sm:$0xff]
        %v509 = vld [vmem:[#allocation2 + $0x498] sm:$0xff]
        %v510 = vld [vmem:[#allocation2 + $0x4a0] sm:$0xff]
        %v511 = vld [vmem:[#allocation2 + $0x4a8] sm:$0xff]
        %v512 = vld [vmem:[#allocation2 + $0x4b0] sm:$0xff]
        %v513 = vld [vmem:[#allocation2 + $0x4b8] sm:$0xff]
        %v514 = vld [vmem:[#allocation2 + $0x4c0] sm:$0xff]
        %v515 = vld [vmem:[#allocation2 + $0x4c8] sm:$0xff]
        %v516 = vld [vmem:[#allocation2 + $0x4d0] sm:$0xff]
        %v517 = vld [vmem:[#allocation2 + $0x4d8] sm:$0xff]
        %v518 = vld [vmem:[#allocation2 + $0x4e0] sm:$0xff]
        %v519 = vld [vmem:[#allocation2 + $0x4e8] sm:$0xff]
        %v520 = vld [vmem:[#allocation2 + $0x4f0] sm:$0xff]
        %v521 = vld [vmem:[#allocation2 + $0x4f8] sm:$0xff]
        %v522 = vld [vmem:[#allocation2 + $0x500] sm:$0xff]
        %v523 = vld [vmem:[#allocation2 + $0x508] sm:$0xff]
        %v524 = vld [vmem:[#allocation2 + $0x510] sm:$0xff]
        %v525 = vld [vmem:[#allocation2 + $0x518] sm:$0xff]
        %v526 = vld [vmem:[#allocation2 + $0x520] sm:$0xff]
        %v527 = vld [vmem:[#allocation2 + $0x528] sm:$0xff]
        %v528 = vld [vmem:[#allocation2 + $0x530] sm:$0xff]
        %v529 = vld [vmem:[#allocation2 + $0x538] sm:$0xff]
        %v530 = vld [vmem:[#allocation2 + $0x540] sm:$0xff]
        %v531 = vld [vmem:[#allocation2 + $0x548] sm:$0xff]
        %v532 = vld [vmem:[#allocation2 + $0x550] sm:$0xff]
        %v533 = vld [vmem:[#allocation2 + $0x558] sm:$0xff]
        %v534 = vld [vmem:[#allocation2 + $0x560] sm:$0xff]
        %v535 = vld [vmem:[#allocation2 + $0x568] sm:$0xff]
        %v536 = vld [vmem:[#allocation2 + $0x570] sm:$0xff]
        %v537 = vld [vmem:[#allocation2 + $0x578] sm:$0xff]
        %v538 = vld [vmem:[#allocation2 + $0x580] sm:$0xff]
        %v539 = vld [vmem:[#allocation2 + $0x588] sm:$0xff]
        %v540 = vld [vmem:[#allocation2 + $0x590] sm:$0xff]
        %v541 = vld [vmem:[#allocation2 + $0x598] sm:$0xff]
        %v542 = vld [vmem:[#allocation2 + $0x5a0] sm:$0xff]
        %v543 = vld [vmem:[#allocation2 + $0x5a8] sm:$0xff]
        %v544 = vld [vmem:[#allocation2 + $0x5b0] sm:$0xff]
        %v545 = vld [vmem:[#allocation2 + $0x5b8] sm:$0xff]
        %v546 = vld [vmem:[#allocation2 + $0x5c0] sm:$0xff]
        %v547 = vld [vmem:[#allocation2 + $0x5c8] sm:$0xff]
        %v548 = vld [vmem:[#allocation2 + $0x5d0] sm:$0xff]
        %v549 = vld [vmem:[#allocation2 + $0x5d8] sm:$0xff]
        %v550 = vld [vmem:[#allocation2 + $0x5e0] sm:$0xff]
        %v551 = vld [vmem:[#allocation2 + $0x5e8] sm:$0xff]
        %v552 = vld [vmem:[#allocation2 + $0x5f0] sm:$0xff]
        %v553 = vld [vmem:[#allocation2 + $0x5f8] sm:$0xff]
        %v554 = vld [vmem:[#allocation2 + $0x600] sm:$0xff]
        %v555 = vld [vmem:[#allocation2 + $0x608] sm:$0xff]
        %v556 = vld [vmem:[#allocation2 + $0x610] sm:$0xff]
        %v557 = vld [vmem:[#allocation2 + $0x618] sm:$0xff]
        %v558 = vld [vmem:[%s2] sm:$0xf]
        %v560 = vperm.slane %v558, 0
        %v561 = vperm.slane %v558, 1
        %v562 = vperm.slane %v558, 2
        %v563 = vperm.slane %v558, 3
        %v764 = vunpack.c.l.b16 %v362
        %v765 = vunpack.c.h.b16 %v362
        %v766 = vunpack.c.l.b16 %v363
        %v767 = vunpack.c.h.b16 %v363
        %v768 = vunpack.c.l.b16 %v364
        %v769 = vunpack.c.h.b16 %v364
        %v770 = vunpack.c.l.b16 %v365
        %v771 = vunpack.c.h.b16 %v365
        %v772 = vunpack.c.l.b16 %v366
        %v773 = vunpack.c.h.b16 %v366
        %v774 = vunpack.c.l.b16 %v367
        %v775 = vunpack.c.h.b16 %v367
        %v776 = vunpack.c.l.b16 %v368
        %v777 = vunpack.c.h.b16 %v368
        %v778 = vunpack.c.l.b16 %v369
        %v779 = vunpack.c.h.b16 %v369
        %v780 = vunpack.c.l.b16 %v370
        %v781 = vunpack.c.h.b16 %v370
        %v782 = vunpack.c.l.b16 %v371
        %v783 = vunpack.c.h.b16 %v371
        %v784 = vunpack.c.l.b16 %v372
        %v785 = vunpack.c.h.b16 %v372
        %v786 = vunpack.c.l.b16 %v373
        %v787 = vunpack.c.h.b16 %v373
        %v788 = vunpack.c.l.b16 %v374
        %v789 = vunpack.c.h.b16 %v374
        %v790 = vunpack.c.l.b16 %v375
        %v791 = vunpack.c.h.b16 %v375
        %v792 = vunpack.c.l.b16 %v376
        %v793 = vunpack.c.h.b16 %v376
        %v794 = vunpack.c.l.b16 %v377
        %v795 = vunpack.c.h.b16 %v377
        %v796 = vunpack.c.l.b16 %v378
        %v797 = vunpack.c.h.b16 %v378
        %v798 = vunpack.c.l.b16 %v379
        %v799 = vunpack.c.h.b16 %v379
        %v800 = vunpack.c.l.b16 %v380
        %v801 = vunpack.c.h.b16 %v380
        %v802 = vunpack.c.l.b16 %v381
        %v803 = vunpack.c.h.b16 %v381
        %v804 = vunpack.c.l.b16 %v382
        %v805 = vunpack.c.h.b16 %v382
        %v806 = vunpack.c.l.b16 %v383
        %v807 = vunpack.c.h.b16 %v383
        %v808 = vunpack.c.l.b16 %v384
        %v809 = vunpack.c.h.b16 %v384
        %v810 = vunpack.c.l.b16 %v385
        %v811 = vunpack.c.h.b16 %v385
        %v812 = vunpack.c.l.b16 %v386
        %v813 = vunpack.c.h.b16 %v386
        %v814 = vunpack.c.l.b16 %v387
        %v815 = vunpack.c.h.b16 %v387
        %v816 = vunpack.c.l.b16 %v388
        %v817 = vunpack.c.h.b16 %v388
        %v818 = vunpack.c.l.b16 %v389
        %v819 = vunpack.c.h.b16 %v389
        %v820 = vunpack.c.l.b16 %v390
        %v821 = vunpack.c.h.b16 %v390
        %v822 = vunpack.c.l.b16 %v391
        %v823 = vunpack.c.h.b16 %v391
        %v824 = vunpack.c.l.b16 %v392
        %v825 = vunpack.c.h.b16 %v392
        %v826 = vunpack.c.l.b16 %v393
        %v827 = vunpack.c.h.b16 %v393
        %v828 = vunpack.c.l.b16 %v394
        %v829 = vunpack.c.h.b16 %v394
        %v830 = vunpack.c.l.b16 %v395
        %v831 = vunpack.c.h.b16 %v395
        %v832 = vunpack.c.l.b16 %v396
        %v833 = vunpack.c.h.b16 %v396
        %v834 = vunpack.c.l.b16 %v397
        %v835 = vunpack.c.h.b16 %v397
        %v836 = vunpack.c.l.b16 %v398
        %v837 = vunpack.c.h.b16 %v398
        %v838 = vunpack.c.l.b16 %v399
        %v839 = vunpack.c.h.b16 %v399
        %v840 = vunpack.c.l.b16 %v400
        %v841 = vunpack.c.h.b16 %v400
        %v842 = vunpack.c.l.b16 %v401
        %v843 = vunpack.c.h.b16 %v401
        %v844 = vunpack.c.l.b16 %v402
        %v845 = vunpack.c.h.b16 %v402
        %v846 = vunpack.c.l.b16 %v403
        %v847 = vunpack.c.h.b16 %v403
        %v848 = vunpack.c.l.b16 %v404
        %v849 = vunpack.c.h.b16 %v404
        %v850 = vunpack.c.l.b16 %v405
        %v851 = vunpack.c.h.b16 %v405
        %v852 = vunpack.c.l.b16 %v406
        %v853 = vunpack.c.h.b16 %v406
        %v854 = vunpack.c.l.b16 %v407
        %v855 = vunpack.c.h.b16 %v407
        %v856 = vunpack.c.l.b16 %v408
        %v857 = vunpack.c.h.b16 %v408
        %v858 = vunpack.c.l.b16 %v409
        %v859 = vunpack.c.h.b16 %v409
        %v860 = vunpack.c.l.b16 %v410
        %v861 = vunpack.c.h.b16 %v410
        %v862 = vunpack.c.l.b16 %v411
        %v863 = vunpack.c.h.b16 %v411
        %v864 = vunpack.c.l.b16 %v412
        %v865 = vunpack.c.h.b16 %v412
        %v866 = vunpack.c.l.b16 %v413
        %v867 = vunpack.c.h.b16 %v413
        %v868 = vunpack.c.l.b16 %v414
        %v869 = vunpack.c.h.b16 %v414
        %v870 = vunpack.c.l.b16 %v415
        %v871 = vunpack.c.h.b16 %v415
        %v872 = vunpack.c.l.b16 %v416
        %v873 = vunpack.c.h.b16 %v416
        %v874 = vunpack.c.l.b16 %v417
        %v875 = vunpack.c.h.b16 %v417
        %v876 = vunpack.c.l.b16 %v418
        %v877 = vunpack.c.h.b16 %v418
        %v878 = vunpack.c.l.b16 %v419
        %v879 = vunpack.c.h.b16 %v419
        %v880 = vunpack.c.l.b16 %v420
        %v881 = vunpack.c.h.b16 %v420
        %v882 = vunpack.c.l.b16 %v421
        %v883 = vunpack.c.h.b16 %v421
        %v884 = vunpack.c.l.b16 %v422
        %v885 = vunpack.c.h.b16 %v422
        %v886 = vunpack.c.l.b16 %v423
        %v887 = vunpack.c.h.b16 %v423
        %v888 = vunpack.c.l.b16 %v424
        %v889 = vunpack.c.h.b16 %v424
        %v890 = vunpack.c.l.b16 %v425
        %v891 = vunpack.c.h.b16 %v425
        %v892 = vunpack.c.l.b16 %v426
        %v893 = vunpack.c.h.b16 %v426
        %v894 = vunpack.c.l.b16 %v427
        %v895 = vunpack.c.h.b16 %v427
        %v896 = vunpack.c.l.b16 %v428
        %v897 = vunpack.c.h.b16 %v428
        %v898 = vunpack.c.l.b16 %v429
        %v899 = vunpack.c.h.b16 %v429
        %v900 = vunpack.c.l.b16 %v430
        %v901 = vunpack.c.h.b16 %v430
        %v902 = vunpack.c.l.b16 %v431
        %v903 = vunpack.c.h.b16 %v431
        %v904 = vunpack.c.l.b16 %v432
        %v905 = vunpack.c.h.b16 %v432
        %v906 = vunpack.c.l.b16 %v433
        %v907 = vunpack.c.h.b16 %v433
        %v908 = vunpack.c.l.b16 %v434
        %v909 = vunpack.c.h.b16 %v434
        %v910 = vunpack.c.l.b16 %v435
        %v911 = vunpack.c.h.b16 %v435
        %v912 = vunpack.c.l.b16 %v436
        %v913 = vunpack.c.h.b16 %v436
        %v914 = vunpack.c.l.b16 %v437
        %v915 = vunpack.c.h.b16 %v437
        %v916 = vunpack.c.l.b16 %v438
        %v917 = vunpack.c.h.b16 %v438
        %v918 = vunpack.c.l.b16 %v439
        %v919 = vunpack.c.h.b16 %v439
        %v920 = vunpack.c.l.b16 %v440
        %v921 = vunpack.c.h.b16 %v440
        %v922 = vunpack.c.l.b16 %v441
        %v923 = vunpack.c.h.b16 %v441
        %v924 = vunpack.c.l.b16 %v442
        %v925 = vunpack.c.h.b16 %v442
        %v926 = vunpack.c.l.b16 %v443
        %v927 = vunpack.c.h.b16 %v443
        %v928 = vunpack.c.l.b16 %v444
        %v929 = vunpack.c.h.b16 %v444
        %v930 = vunpack.c.l.b16 %v445
        %v931 = vunpack.c.h.b16 %v445
        %v932 = vunpack.c.l.b16 %v446
        %v933 = vunpack.c.h.b16 %v446
        %v934 = vunpack.c.l.b16 %v447
        %v935 = vunpack.c.h.b16 %v447
        %v936 = vunpack.c.l.b16 %v448
        %v937 = vunpack.c.h.b16 %v448
        %v938 = vunpack.c.l.b16 %v449
        %v939 = vunpack.c.h.b16 %v449
        %v940 = vunpack.c.l.b16 %v450
        %v941 = vunpack.c.h.b16 %v450
        %v942 = vunpack.c.l.b16 %v451
        %v943 = vunpack.c.h.b16 %v451
        %v944 = vunpack.c.l.b16 %v452
        %v945 = vunpack.c.h.b16 %v452
        %v946 = vunpack.c.l.b16 %v453
        %v947 = vunpack.c.h.b16 %v453
        %v948 = vunpack.c.l.b16 %v454
        %v949 = vunpack.c.h.b16 %v454
        %v950 = vunpack.c.l.b16 %v455
        %v951 = vunpack.c.h.b16 %v455
        %v952 = vunpack.c.l.b16 %v456
        %v953 = vunpack.c.h.b16 %v456
        %v954 = vunpack.c.l.b16 %v457
        %v955 = vunpack.c.h.b16 %v457
        %v956 = vunpack.c.l.b16 %v458
        %v957 = vunpack.c.h.b16 %v458
        %v958 = vunpack.c.l.b16 %v459
        %v959 = vunpack.c.h.b16 %v459
        %v960 = vunpack.c.l.b16 %v460
        %v961 = vunpack.c.h.b16 %v460
        %v962 = vunpack.c.l.b16 %v461
        %v963 = vunpack.c.h.b16 %v461
        %v964 = vunpack.c.l.b16 %v462
        %v965 = vunpack.c.h.b16 %v462
        %v966 = vunpack.c.l.b16 %v463
        %v967 = vunpack.c.h.b16 %v463
        %v968 = vunpack.c.l.b16 %v464
        %v969 = vunpack.c.h.b16 %v464
        %v970 = vunpack.c.l.b16 %v465
        %v971 = vunpack.c.h.b16 %v465
        %v972 = vunpack.c.l.b16 %v466
        %v973 = vunpack.c.h.b16 %v466
        %v974 = vunpack.c.l.b16 %v467
        %v975 = vunpack.c.h.b16 %v467
        %v976 = vunpack.c.l.b16 %v468
        %v977 = vunpack.c.h.b16 %v468
        %v978 = vunpack.c.l.b16 %v469
        %v979 = vunpack.c.h.b16 %v469
        %v980 = vunpack.c.l.b16 %v470
        %v981 = vunpack.c.h.b16 %v470
        %v982 = vunpack.c.l.b16 %v471
        %v983 = vunpack.c.h.b16 %v471
        %v984 = vunpack.c.l.b16 %v472
        %v985 = vunpack.c.h.b16 %v472
        %v986 = vunpack.c.l.b16 %v473
        %v987 = vunpack.c.h.b16 %v473
        %v988 = vunpack.c.l.b16 %v474
        %v989 = vunpack.c.h.b16 %v474
        %v990 = vunpack.c.l.b16 %v475
        %v991 = vunpack.c.h.b16 %v475
        %v992 = vunpack.c.l.b16 %v476
        %v993 = vunpack.c.h.b16 %v476
        %v994 = vunpack.c.l.b16 %v477
        %v995 = vunpack.c.h.b16 %v477
        %v996 = vunpack.c.l.b16 %v478
        %v997 = vunpack.c.h.b16 %v478
        %v998 = vunpack.c.l.b16 %v479
        %v999 = vunpack.c.h.b16 %v479
        %v1000 = vunpack.c.l.b16 %v480
        %v1001 = vunpack.c.h.b16 %v480
        %v1002 = vunpack.c.l.b16 %v481
        %v1003 = vunpack.c.h.b16 %v481
        %v1004 = vunpack.c.l.b16 %v482
        %v1005 = vunpack.c.h.b16 %v482
        %v1006 = vunpack.c.l.b16 %v483
        %v1007 = vunpack.c.h.b16 %v483
        %v1008 = vunpack.c.l.b16 %v484
        %v1009 = vunpack.c.h.b16 %v484
        %v1010 = vunpack.c.l.b16 %v485
        %v1011 = vunpack.c.h.b16 %v485
        %v1012 = vunpack.c.l.b16 %v486
        %v1013 = vunpack.c.h.b16 %v486
        %v1014 = vunpack.c.l.b16 %v487
        %v1015 = vunpack.c.h.b16 %v487
        %v1016 = vunpack.c.l.b16 %v488
        %v1017 = vunpack.c.h.b16 %v488
        %v1018 = vunpack.c.l.b16 %v489
        %v1019 = vunpack.c.h.b16 %v489
        %v1020 = vunpack.c.l.b16 %v490
        %v1021 = vunpack.c.h.b16 %v490
        %v1022 = vunpack.c.l.b16 %v491
        %v1023 = vunpack.c.h.b16 %v491
        %v1024 = vunpack.c.l.b16 %v492
        %v1025 = vunpack.c.h.b16 %v492
        %v1026 = vunpack.c.l.b16 %v493
        %v1027 = vunpack.c.h.b16 %v493
        %v1028 = vunpack.c.l.b16 %v494
        %v1029 = vunpack.c.h.b16 %v494
        %v1030 = vunpack.c.l.b16 %v495
        %v1031 = vunpack.c.h.b16 %v495
        %v1032 = vunpack.c.l.b16 %v496
        %v1033 = vunpack.c.h.b16 %v496
        %v1034 = vunpack.c.l.b16 %v497
        %v1035 = vunpack.c.h.b16 %v497
        %v1036 = vunpack.c.l.b16 %v498
        %v1037 = vunpack.c.h.b16 %v498
        %v1038 = vunpack.c.l.b16 %v499
        %v1039 = vunpack.c.h.b16 %v499
        %v1040 = vunpack.c.l.b16 %v500
        %v1041 = vunpack.c.h.b16 %v500
        %v1042 = vunpack.c.l.b16 %v501
        %v1043 = vunpack.c.h.b16 %v501
        %v1044 = vunpack.c.l.b16 %v502
        %v1045 = vunpack.c.h.b16 %v502
        %v1046 = vunpack.c.l.b16 %v503
        %v1047 = vunpack.c.h.b16 %v503
        %v1048 = vunpack.c.l.b16 %v504
        %v1049 = vunpack.c.h.b16 %v504
        %v1050 = vunpack.c.l.b16 %v505
        %v1051 = vunpack.c.h.b16 %v505
        %v1052 = vunpack.c.l.b16 %v506
        %v1053 = vunpack.c.h.b16 %v506
        %v1054 = vunpack.c.l.b16 %v507
        %v1055 = vunpack.c.h.b16 %v507
        %v1056 = vunpack.c.l.b16 %v508
        %v1057 = vunpack.c.h.b16 %v508
        %v1058 = vunpack.c.l.b16 %v509
        %v1059 = vunpack.c.h.b16 %v509
        %v1060 = vunpack.c.l.b16 %v510
        %v1061 = vunpack.c.h.b16 %v510
        %v1062 = vunpack.c.l.b16 %v511
        %v1063 = vunpack.c.h.b16 %v511
        %v1064 = vunpack.c.l.b16 %v512
        %v1065 = vunpack.c.h.b16 %v512
        %v1066 = vunpack.c.l.b16 %v513
        %v1067 = vunpack.c.h.b16 %v513
        %v1068 = vunpack.c.l.b16 %v514
        %v1069 = vunpack.c.h.b16 %v514
        %v1070 = vunpack.c.l.b16 %v515
        %v1071 = vunpack.c.h.b16 %v515
        %v1072 = vunpack.c.l.b16 %v516
        %v1073 = vunpack.c.h.b16 %v516
        %v1074 = vunpack.c.l.b16 %v517
        %v1075 = vunpack.c.h.b16 %v517
        %v1076 = vunpack.c.l.b16 %v518
        %v1077 = vunpack.c.h.b16 %v518
        %v1078 = vunpack.c.l.b16 %v519
        %v1079 = vunpack.c.h.b16 %v519
        %v1080 = vunpack.c.l.b16 %v520
        %v1081 = vunpack.c.h.b16 %v520
        %v1082 = vunpack.c.l.b16 %v521
        %v1083 = vunpack.c.h.b16 %v521
        %v1084 = vunpack.c.l.b16 %v522
        %v1085 = vunpack.c.h.b16 %v522
        %v1086 = vunpack.c.l.b16 %v523
        %v1087 = vunpack.c.h.b16 %v523
        %v1088 = vunpack.c.l.b16 %v524
        %v1089 = vunpack.c.h.b16 %v524
        %v1090 = vunpack.c.l.b16 %v525
        %v1091 = vunpack.c.h.b16 %v525
        %v1092 = vunpack.c.l.b16 %v526
        %v1093 = vunpack.c.h.b16 %v526
        %v1094 = vunpack.c.l.b16 %v527
        %v1095 = vunpack.c.h.b16 %v527
        %v1096 = vunpack.c.l.b16 %v528
        %v1097 = vunpack.c.h.b16 %v528
        %v1098 = vunpack.c.l.b16 %v529
        %v1099 = vunpack.c.h.b16 %v529
        %v1100 = vunpack.c.l.b16 %v530
        %v1101 = vunpack.c.h.b16 %v530
        %v1102 = vunpack.c.l.b16 %v531
        %v1103 = vunpack.c.h.b16 %v531
        %v1104 = vunpack.c.l.b16 %v532
        %v1105 = vunpack.c.h.b16 %v532
        %v1106 = vunpack.c.l.b16 %v533
        %v1107 = vunpack.c.h.b16 %v533
        %v1108 = vunpack.c.l.b16 %v534
        %v1109 = vunpack.c.h.b16 %v534
        %v1110 = vunpack.c.l.b16 %v535
        %v1111 = vunpack.c.h.b16 %v535
        %v1112 = vunpack.c.l.b16 %v536
        %v1113 = vunpack.c.h.b16 %v536
        %v1114 = vunpack.c.l.b16 %v537
        %v1115 = vunpack.c.h.b16 %v537
        %v1116 = vunpack.c.l.b16 %v538
        %v1117 = vunpack.c.h.b16 %v538
        %v1118 = vunpack.c.l.b16 %v539
        %v1119 = vunpack.c.h.b16 %v539
        %v1120 = vunpack.c.l.b16 %v540
        %v1121 = vunpack.c.h.b16 %v540
        %v1122 = vunpack.c.l.b16 %v541
        %v1123 = vunpack.c.h.b16 %v541
        %v1124 = vunpack.c.l.b16 %v542
        %v1125 = vunpack.c.h.b16 %v542
        %v1126 = vunpack.c.l.b16 %v543
        %v1127 = vunpack.c.h.b16 %v543
        %v1128 = vunpack.c.l.b16 %v544
        %v1129 = vunpack.c.h.b16 %v544
        %v1130 = vunpack.c.l.b16 %v545
        %v1131 = vunpack.c.h.b16 %v545
        %v1132 = vunpack.c.l.b16 %v546
        %v1133 = vunpack.c.h.b16 %v546
        %v1134 = vunpack.c.l.b16 %v547
        %v1135 = vunpack.c.h.b16 %v547
        %v1136 = vunpack.c.l.b16 %v548
        %v1137 = vunpack.c.h.b16 %v548
        %v1138 = vunpack.c.l.b16 %v549
        %v1139 = vunpack.c.h.b16 %v549
        %v1140 = vunpack.c.l.b16 %v550
        %v1141 = vunpack.c.h.b16 %v550
        %v1142 = vunpack.c.l.b16 %v551
        %v1143 = vunpack.c.h.b16 %v551
        %v1144 = vunpack.c.l.b16 %v552
        %v1145 = vunpack.c.h.b16 %v552
        %v1146 = vunpack.c.l.b16 %v553
        %v1147 = vunpack.c.h.b16 %v553
        %v1148 = vunpack.c.l.b16 %v554
        %v1149 = vunpack.c.h.b16 %v554
        %v1150 = vunpack.c.l.b16 %v555
        %v1151 = vunpack.c.h.b16 %v555
        %v1152 = vunpack.c.l.b16 %v556
        %v1153 = vunpack.c.h.b16 %v556
        %v1154 = vunpack.c.l.b16 %v557
        %v1155 = vunpack.c.h.b16 %v557
        %v1156 = vpack.c.b16 %v768, %v764
        %v1157 = vpack.c.b16 %v769, %v765
        %v1158 = vpack.c.b16 %v770, %v766
        %v1159 = vpack.c.b16 %v771, %v767
        %v1160 = vpack.c.b16 %v776, %v772
        %v1161 = vpack.c.b16 %v777, %v773
        %v1162 = vpack.c.b16 %v778, %v774
        %v1163 = vpack.c.b16 %v779, %v775
        %v1164 = vpack.c.b16 %v784, %v780
        %v1165 = vpack.c.b16 %v785, %v781
        %v1166 = vpack.c.b16 %v786, %v782
        %v1167 = vpack.c.b16 %v787, %v783
        %v1168 = vpack.c.b16 %v792, %v788
        %v1169 = vpack.c.b16 %v793, %v789
        %v1170 = vpack.c.b16 %v794, %v790
        %v1171 = vpack.c.b16 %v795, %v791
        %v1172 = vpack.c.b16 %v800, %v796
        %v1173 = vpack.c.b16 %v801, %v797
        %v1174 = vpack.c.b16 %v802, %v798
        %v1175 = vpack.c.b16 %v803, %v799
        %v1176 = vpack.c.b16 %v808, %v804
        %v1177 = vpack.c.b16 %v809, %v805
        %v1178 = vpack.c.b16 %v810, %v806
        %v1179 = vpack.c.b16 %v811, %v807
        %v1180 = vpack.c.b16 %v816, %v812
        %v1181 = vpack.c.b16 %v817, %v813
        %v1182 = vpack.c.b16 %v818, %v814
        %v1183 = vpack.c.b16 %v819, %v815
        %v1184 = vpack.c.b16 %v824, %v820
        %v1185 = vpack.c.b16 %v825, %v821
        %v1186 = vpack.c.b16 %v826, %v822
        %v1187 = vpack.c.b16 %v827, %v823
        %v1188 = vpack.c.b16 %v832, %v828
        %v1189 = vpack.c.b16 %v833, %v829
        %v1190 = vpack.c.b16 %v834, %v830
        %v1191 = vpack.c.b16 %v835, %v831
        %v1192 = vpack.c.b16 %v840, %v836
        %v1193 = vpack.c.b16 %v841, %v837
        %v1194 = vpack.c.b16 %v842, %v838
        %v1195 = vpack.c.b16 %v843, %v839
        %v1196 = vpack.c.b16 %v848, %v844
        %v1197 = vpack.c.b16 %v849, %v845
        %v1198 = vpack.c.b16 %v850, %v846
        %v1199 = vpack.c.b16 %v851, %v847
        %v1200 = vpack.c.b16 %v856, %v852
        %v1201 = vpack.c.b16 %v857, %v853
        %v1202 = vpack.c.b16 %v858, %v854
        %v1203 = vpack.c.b16 %v859, %v855
        %v1204 = vpack.c.b16 %v864, %v860
        %v1205 = vpack.c.b16 %v865, %v861
        %v1206 = vpack.c.b16 %v866, %v862
        %v1207 = vpack.c.b16 %v867, %v863
        %v1208 = vpack.c.b16 %v872, %v868
        %v1209 = vpack.c.b16 %v873, %v869
        %v1210 = vpack.c.b16 %v874, %v870
        %v1211 = vpack.c.b16 %v875, %v871
        %v1212 = vpack.c.b16 %v880, %v876
        %v1213 = vpack.c.b16 %v881, %v877
        %v1214 = vpack.c.b16 %v882, %v878
        %v1215 = vpack.c.b16 %v883, %v879
        %v1216 = vpack.c.b16 %v888, %v884
        %v1217 = vpack.c.b16 %v889, %v885
        %v1218 = vpack.c.b16 %v890, %v886
        %v1219 = vpack.c.b16 %v891, %v887
        %v1220 = vpack.c.b16 %v896, %v892
        %v1221 = vpack.c.b16 %v897, %v893
        %v1222 = vpack.c.b16 %v898, %v894
        %v1223 = vpack.c.b16 %v899, %v895
        %v1224 = vpack.c.b16 %v904, %v900
        %v1225 = vpack.c.b16 %v905, %v901
        %v1226 = vpack.c.b16 %v906, %v902
        %v1227 = vpack.c.b16 %v907, %v903
        %v1228 = vpack.c.b16 %v912, %v908
        %v1229 = vpack.c.b16 %v913, %v909
        %v1230 = vpack.c.b16 %v914, %v910
        %v1231 = vpack.c.b16 %v915, %v911
        %v1232 = vpack.c.b16 %v920, %v916
        %v1233 = vpack.c.b16 %v921, %v917
        %v1234 = vpack.c.b16 %v922, %v918
        %v1235 = vpack.c.b16 %v923, %v919
        %v1236 = vpack.c.b16 %v928, %v924
        %v1237 = vpack.c.b16 %v929, %v925
        %v1238 = vpack.c.b16 %v930, %v926
        %v1239 = vpack.c.b16 %v931, %v927
        %v1240 = vpack.c.b16 %v936, %v932
        %v1241 = vpack.c.b16 %v937, %v933
        %v1242 = vpack.c.b16 %v938, %v934
        %v1243 = vpack.c.b16 %v939, %v935
        %v1244 = vpack.c.b16 %v944, %v940
        %v1245 = vpack.c.b16 %v945, %v941
        %v1246 = vpack.c.b16 %v946, %v942
        %v1247 = vpack.c.b16 %v947, %v943
        %v1248 = vpack.c.b16 %v952, %v948
        %v1249 = vpack.c.b16 %v953, %v949
        %v1250 = vpack.c.b16 %v954, %v950
        %v1251 = vpack.c.b16 %v955, %v951
        %v1252 = vpack.c.b16 %v960, %v956
        %v1253 = vpack.c.b16 %v961, %v957
        %v1254 = vpack.c.b16 %v962, %v958
        %v1255 = vpack.c.b16 %v963, %v959
        %v1256 = vpack.c.b16 %v968, %v964
        %v1257 = vpack.c.b16 %v969, %v965
        %v1258 = vpack.c.b16 %v970, %v966
        %v1259 = vpack.c.b16 %v971, %v967
        %v1260 = vpack.c.b16 %v976, %v972
        %v1261 = vpack.c.b16 %v977, %v973
        %v1262 = vpack.c.b16 %v978, %v974
        %v1263 = vpack.c.b16 %v979, %v975
        %v1264 = vpack.c.b16 %v984, %v980
        %v1265 = vpack.c.b16 %v985, %v981
        %v1266 = vpack.c.b16 %v986, %v982
        %v1267 = vpack.c.b16 %v987, %v983
        %v1268 = vpack.c.b16 %v992, %v988
        %v1269 = vpack.c.b16 %v993, %v989
        %v1270 = vpack.c.b16 %v994, %v990
        %v1271 = vpack.c.b16 %v995, %v991
        %v1272 = vpack.c.b16 %v1000, %v996
        %v1273 = vpack.c.b16 %v1001, %v997
        %v1274 = vpack.c.b16 %v1002, %v998
        %v1275 = vpack.c.b16 %v1003, %v999
        %v1276 = vpack.c.b16 %v1008, %v1004
        %v1277 = vpack.c.b16 %v1009, %v1005
        %v1278 = vpack.c.b16 %v1010, %v1006
        %v1279 = vpack.c.b16 %v1011, %v1007
        %v1280 = vpack.c.b16 %v1016, %v1012
        %v1281 = vpack.c.b16 %v1017, %v1013
        %v1282 = vpack.c.b16 %v1018, %v1014
        %v1283 = vpack.c.b16 %v1019, %v1015
        %v1284 = vpack.c.b16 %v1024, %v1020
        %v1285 = vpack.c.b16 %v1025, %v1021
        %v1286 = vpack.c.b16 %v1026, %v1022
        %v1287 = vpack.c.b16 %v1027, %v1023
        %v1288 = vpack.c.b16 %v1032, %v1028
        %v1289 = vpack.c.b16 %v1033, %v1029
        %v1290 = vpack.c.b16 %v1034, %v1030
        %v1291 = vpack.c.b16 %v1035, %v1031
        %v1292 = vpack.c.b16 %v1040, %v1036
        %v1293 = vpack.c.b16 %v1041, %v1037
        %v1294 = vpack.c.b16 %v1042, %v1038
        %v1295 = vpack.c.b16 %v1043, %v1039
        %v1296 = vpack.c.b16 %v1048, %v1044
        %v1297 = vpack.c.b16 %v1049, %v1045
        %v1298 = vpack.c.b16 %v1050, %v1046
        %v1299 = vpack.c.b16 %v1051, %v1047
        %v1300 = vpack.c.b16 %v1056, %v1052
        %v1301 = vpack.c.b16 %v1057, %v1053
        %v1302 = vpack.c.b16 %v1058, %v1054
        %v1303 = vpack.c.b16 %v1059, %v1055
        %v1304 = vpack.c.b16 %v1064, %v1060
        %v1305 = vpack.c.b16 %v1065, %v1061
        %v1306 = vpack.c.b16 %v1066, %v1062
        %v1307 = vpack.c.b16 %v1067, %v1063
        %v1308 = vpack.c.b16 %v1072, %v1068
        %v1309 = vpack.c.b16 %v1073, %v1069
        %v1310 = vpack.c.b16 %v1074, %v1070
        %v1311 = vpack.c.b16 %v1075, %v1071
        %v1312 = vpack.c.b16 %v1080, %v1076
        %v1313 = vpack.c.b16 %v1081, %v1077
        %v1314 = vpack.c.b16 %v1082, %v1078
        %v1315 = vpack.c.b16 %v1083, %v1079
        %v1316 = vpack.c.b16 %v1088, %v1084
        %v1317 = vpack.c.b16 %v1089, %v1085
        %v1318 = vpack.c.b16 %v1090, %v1086
        %v1319 = vpack.c.b16 %v1091, %v1087
        %v1320 = vpack.c.b16 %v1096, %v1092
        %v1321 = vpack.c.b16 %v1097, %v1093
        %v1322 = vpack.c.b16 %v1098, %v1094
        %v1323 = vpack.c.b16 %v1099, %v1095
        %v1324 = vpack.c.b16 %v1104, %v1100
        %v1325 = vpack.c.b16 %v1105, %v1101
        %v1326 = vpack.c.b16 %v1106, %v1102
        %v1327 = vpack.c.b16 %v1107, %v1103
        %v1328 = vpack.c.b16 %v1112, %v1108
        %v1329 = vpack.c.b16 %v1113, %v1109
        %v1330 = vpack.c.b16 %v1114, %v1110
        %v1331 = vpack.c.b16 %v1115, %v1111
        %v1332 = vpack.c.b16 %v1120, %v1116
        %v1333 = vpack.c.b16 %v1121, %v1117
        %v1334 = vpack.c.b16 %v1122, %v1118
        %v1335 = vpack.c.b16 %v1123, %v1119
        %v1336 = vpack.c.b16 %v1128, %v1124
        %v1337 = vpack.c.b16 %v1129, %v1125
        %v1338 = vpack.c.b16 %v1130, %v1126
        %v1339 = vpack.c.b16 %v1131, %v1127
        %v1340 = vpack.c.b16 %v1136, %v1132
        %v1341 = vpack.c.b16 %v1137, %v1133
        %v1342 = vpack.c.b16 %v1138, %v1134
        %v1343 = vpack.c.b16 %v1139, %v1135
        %v1344 = vpack.c.b16 %v1144, %v1140
        %v1345 = vpack.c.b16 %v1145, %v1141
        %v1346 = vpack.c.b16 %v1146, %v1142
        %v1347 = vpack.c.b16 %v1147, %v1143
        %v1348 = vpack.c.b16 %v1152, %v1148
        %v1349 = vpack.c.b16 %v1153, %v1149
        %v1350 = vpack.c.b16 %v1154, %v1150
        %v1351 = vpack.c.b16 %v1155, %v1151
        %vm1548 = vcmask 130048
        %v1550 = vsel %vm1548, %v354, 0
        %v1553 = vsel %vm1548, %v361, 0
        %1555 = vmatpush.bf16.msra.mxu0 %v1184
        %1556 = vmatpush.bf16.msra.mxu0 %v1180
        %1557 = vmatpush.bf16.msra.mxu0 %v1176
        %1558 = vmatpush.bf16.msra.mxu0 %v1172
        %1559 = vmatpush.bf16.msra.mxu0 %v1168
        %1560 = vmatpush.bf16.msra.mxu0 %v1164
        %1561 = vmatpush.bf16.msra.mxu0 %v1160
        %1562 = vmatpush.bf16.msra.mxu0 %v1156
        %1563 = vmatmul.bf16.gmra.mxu0 %v348
        %v1564 = vpop.f32.mrf.mxu0
        %v1565 = vadd.f32 %v560, %v1564
        %v1566 = vpop.f32.mrf.mxu0
        %v1567 = vadd.f32 %v560, %v1566
        %1568 = vmatmul.bf16.gmra.mxu0 %v355
        %v1569 = vpop.f32.mrf.mxu0
        %v1570 = vadd.f32 %v560, %v1569
        %v1571 = vpop.f32.mrf.mxu0
        %v1572 = vadd.f32 %v560, %v1571
        %1573 = vdwg.mxu0
        %1574 = vmatpush.bf16.msra.mxu0 %v1216
        %1575 = vmatpush.bf16.msra.mxu0 %v1212
        %1576 = vmatpush.bf16.msra.mxu0 %v1208
        %1577 = vmatpush.bf16.msra.mxu0 %v1204
        %1578 = vmatpush.bf16.msra.mxu0 %v1200
        %1579 = vmatpush.bf16.msra.mxu0 %v1196
        %1580 = vmatpush.bf16.msra.mxu0 %v1192
        %1581 = vmatpush.bf16.msra.mxu0 %v1188
        %1582 = vmatmul.bf16.gmra.mxu0 %v349
        %v1583 = vpop.f32.mrf.mxu0
        %v1584 = vadd.f32 %v1565, %v1583
        %v1585 = vpop.f32.mrf.mxu0
        %v1586 = vadd.f32 %v1567, %v1585
        %1587 = vmatmul.bf16.gmra.mxu0 %v356
        %v1588 = vpop.f32.mrf.mxu0
        %v1589 = vadd.f32 %v1570, %v1588
        %v1590 = vpop.f32.mrf.mxu0
        %v1591 = vadd.f32 %v1572, %v1590
        %1592 = vdwg.mxu0
        %1593 = vmatpush.bf16.msra.mxu0 %v1248
        %1594 = vmatpush.bf16.msra.mxu0 %v1244
        %1595 = vmatpush.bf16.msra.mxu0 %v1240
        %1596 = vmatpush.bf16.msra.mxu0 %v1236
        %1597 = vmatpush.bf16.msra.mxu0 %v1232
        %1598 = vmatpush.bf16.msra.mxu0 %v1228
        %1599 = vmatpush.bf16.msra.mxu0 %v1224
        %1600 = vmatpush.bf16.msra.mxu0 %v1220
        %1601 = vmatmul.bf16.gmra.mxu0 %v350
        %v1602 = vpop.f32.mrf.mxu0
        %v1603 = vadd.f32 %v1584, %v1602
        %v1604 = vpop.f32.mrf.mxu0
        %v1605 = vadd.f32 %v1586, %v1604
        %1606 = vmatmul.bf16.gmra.mxu0 %v357
        %v1607 = vpop.f32.mrf.mxu0
        %v1608 = vadd.f32 %v1589, %v1607
        %v1609 = vpop.f32.mrf.mxu0
        %v1610 = vadd.f32 %v1591, %v1609
        %1611 = vdwg.mxu0
        %1612 = vmatpush.bf16.msra.mxu0 %v1280
        %1613 = vmatpush.bf16.msra.mxu0 %v1276
        %1614 = vmatpush.bf16.msra.mxu0 %v1272
        %1615 = vmatpush.bf16.msra.mxu0 %v1268
        %1616 = vmatpush.bf16.msra.mxu0 %v1264
        %1617 = vmatpush.bf16.msra.mxu0 %v1260
        %1618 = vmatpush.bf16.msra.mxu0 %v1256
        %1619 = vmatpush.bf16.msra.mxu0 %v1252
        %1620 = vmatmul.bf16.gmra.mxu0 %v351
        %v1621 = vpop.f32.mrf.mxu0
        %v1622 = vadd.f32 %v1603, %v1621
        %v1623 = vpop.f32.mrf.mxu0
        %v1624 = vadd.f32 %v1605, %v1623
        %1625 = vmatmul.bf16.gmra.mxu0 %v358
        %v1626 = vpop.f32.mrf.mxu0
        %v1627 = vadd.f32 %v1608, %v1626
        %v1628 = vpop.f32.mrf.mxu0
        %v1629 = vadd.f32 %v1610, %v1628
        %1630 = vdwg.mxu0
        %1631 = vmatpush.bf16.msra.mxu0 %v1312
        %1632 = vmatpush.bf16.msra.mxu0 %v1308
        %1633 = vmatpush.bf16.msra.mxu0 %v1304
        %1634 = vmatpush.bf16.msra.mxu0 %v1300
        %1635 = vmatpush.bf16.msra.mxu0 %v1296
        %1636 = vmatpush.bf16.msra.mxu0 %v1292
        %1637 = vmatpush.bf16.msra.mxu0 %v1288
        %1638 = vmatpush.bf16.msra.mxu0 %v1284
        %1639 = vmatmul.bf16.gmra.mxu0 %v352
        %v1640 = vpop.f32.mrf.mxu0
        %v1641 = vadd.f32 %v1622, %v1640
        %v1642 = vpop.f32.mrf.mxu0
        %v1643 = vadd.f32 %v1624, %v1642
        %1644 = vmatmul.bf16.gmra.mxu0 %v359
        %v1645 = vpop.f32.mrf.mxu0
        %v1646 = vadd.f32 %v1627, %v1645
        %v1647 = vpop.f32.mrf.mxu0
        %v1648 = vadd.f32 %v1629, %v1647
        %1649 = vdwg.mxu0
        %1650 = vmatpush.bf16.msra.mxu0 %v1344
        %1651 = vmatpush.bf16.msra.mxu0 %v1340
        %1652 = vmatpush.bf16.msra.mxu0 %v1336
        %1653 = vmatpush.bf16.msra.mxu0 %v1332
        %1654 = vmatpush.bf16.msra.mxu0 %v1328
        %1655 = vmatpush.bf16.msra.mxu0 %v1324
        %1656 = vmatpush.bf16.msra.mxu0 %v1320
        %1657 = vmatpush.bf16.msra.mxu0 %v1316
        %1658 = vmatmul.bf16.gmra.mxu0 %v353
        %v1659 = vpop.f32.mrf.mxu0
        %v1660 = vadd.f32 %v1641, %v1659
        %v1661 = vpop.f32.mrf.mxu0
        %v1662 = vadd.f32 %v1643, %v1661
        %1663 = vmatmul.bf16.gmra.mxu0 %v360
        %v1664 = vpop.f32.mrf.mxu0
        %v1665 = vadd.f32 %v1646, %v1664
        %v1666 = vpop.f32.mrf.mxu0
        %v1667 = vadd.f32 %v1648, %v1666
        %1668 = vdwg.mxu0
        %1669 = vmatpush.bf16.msra.mxu0 0
        %1670 = vmatpush.bf16.msra.mxu0 0
        %1671 = vmatpush.bf16.msra.mxu0 0
        %1672 = vmatpush.bf16.msra.mxu0 0
        %1673 = vmatpush.bf16.msra.mxu0 0
        %1674 = vmatpush.bf16.msra.mxu0 0
        %1675 = vmatpush.bf16.msra.mxu0 0
        %1676 = vmatpush.bf16.msra.mxu0 %v1348
        %1677 = vmatmul.bf16.gmra.mxu0 %v1550
        %v1678 = vpop.f32.mrf.mxu0
        %v1679 = vadd.f32 %v1660, %v1678
        %v1680 = vpop.f32.mrf.mxu0
        %v1681 = vadd.f32 %v1662, %v1680
        %1682 = vmatmul.bf16.gmra.mxu0 %v1553
        %v1683 = vpop.f32.mrf.mxu0
        %v1684 = vadd.f32 %v1665, %v1683
        %v1685 = vpop.f32.mrf.mxu0
        %v1686 = vadd.f32 %v1667, %v1685
        %1687 = vdwg.mxu0
        %1688 = vmatpush.bf16.msra.mxu0 %v1185
        %1689 = vmatpush.bf16.msra.mxu0 %v1181
        %1690 = vmatpush.bf16.msra.mxu0 %v1177
        %1691 = vmatpush.bf16.msra.mxu0 %v1173
        %1692 = vmatpush.bf16.msra.mxu0 %v1169
        %1693 = vmatpush.bf16.msra.mxu0 %v1165
        %1694 = vmatpush.bf16.msra.mxu0 %v1161
        %1695 = vmatpush.bf16.msra.mxu0 %v1157
        %1696 = vmatmul.bf16.gmra.mxu0 %v348
        %v1697 = vpop.f32.mrf.mxu0
        %v1698 = vadd.f32 %v561, %v1697
        %v1699 = vpop.f32.mrf.mxu0
        %v1700 = vadd.f32 %v561, %v1699
        %1701 = vmatmul.bf16.gmra.mxu0 %v355
        %v1702 = vpop.f32.mrf.mxu0
        %v1703 = vadd.f32 %v561, %v1702
        %v1704 = vpop.f32.mrf.mxu0
        %v1705 = vadd.f32 %v561, %v1704
        %1706 = vdwg.mxu0
        %1707 = vmatpush.bf16.msra.mxu0 %v1217
        %1708 = vmatpush.bf16.msra.mxu0 %v1213
        %1709 = vmatpush.bf16.msra.mxu0 %v1209
        %1710 = vmatpush.bf16.msra.mxu0 %v1205
        %1711 = vmatpush.bf16.msra.mxu0 %v1201
        %1712 = vmatpush.bf16.msra.mxu0 %v1197
        %1713 = vmatpush.bf16.msra.mxu0 %v1193
        %1714 = vmatpush.bf16.msra.mxu0 %v1189
        %1715 = vmatmul.bf16.gmra.mxu0 %v349
        %v1716 = vpop.f32.mrf.mxu0
        %v1717 = vadd.f32 %v1698, %v1716
        %v1718 = vpop.f32.mrf.mxu0
        %v1719 = vadd.f32 %v1700, %v1718
        %1720 = vmatmul.bf16.gmra.mxu0 %v356
        %v1721 = vpop.f32.mrf.mxu0
        %v1722 = vadd.f32 %v1703, %v1721
        %v1723 = vpop.f32.mrf.mxu0
        %v1724 = vadd.f32 %v1705, %v1723
        %1725 = vdwg.mxu0
        %1726 = vmatpush.bf16.msra.mxu0 %v1249
        %1727 = vmatpush.bf16.msra.mxu0 %v1245
        %1728 = vmatpush.bf16.msra.mxu0 %v1241
        %1729 = vmatpush.bf16.msra.mxu0 %v1237
        %1730 = vmatpush.bf16.msra.mxu0 %v1233
        %1731 = vmatpush.bf16.msra.mxu0 %v1229
        %1732 = vmatpush.bf16.msra.mxu0 %v1225
        %1733 = vmatpush.bf16.msra.mxu0 %v1221
        %1734 = vmatmul.bf16.gmra.mxu0 %v350
        %v1735 = vpop.f32.mrf.mxu0
        %v1736 = vadd.f32 %v1717, %v1735
        %v1737 = vpop.f32.mrf.mxu0
        %v1738 = vadd.f32 %v1719, %v1737
        %1739 = vmatmul.bf16.gmra.mxu0 %v357
        %v1740 = vpop.f32.mrf.mxu0
        %v1741 = vadd.f32 %v1722, %v1740
        %v1742 = vpop.f32.mrf.mxu0
        %v1743 = vadd.f32 %v1724, %v1742
        %1744 = vdwg.mxu0
        %1745 = vmatpush.bf16.msra.mxu0 %v1281
        %1746 = vmatpush.bf16.msra.mxu0 %v1277
        %1747 = vmatpush.bf16.msra.mxu0 %v1273
        %1748 = vmatpush.bf16.msra.mxu0 %v1269
        %1749 = vmatpush.bf16.msra.mxu0 %v1265
        %1750 = vmatpush.bf16.msra.mxu0 %v1261
        %1751 = vmatpush.bf16.msra.mxu0 %v1257
        %1752 = vmatpush.bf16.msra.mxu0 %v1253
        %1753 = vmatmul.bf16.gmra.mxu0 %v351
        %v1754 = vpop.f32.mrf.mxu0
        %v1755 = vadd.f32 %v1736, %v1754
        %v1756 = vpop.f32.mrf.mxu0
        %v1757 = vadd.f32 %v1738, %v1756
        %1758 = vmatmul.bf16.gmra.mxu0 %v358
        %v1759 = vpop.f32.mrf.mxu0
        %v1760 = vadd.f32 %v1741, %v1759
        %v1761 = vpop.f32.mrf.mxu0
        %v1762 = vadd.f32 %v1743, %v1761
        %1763 = vdwg.mxu0
        %1764 = vmatpush.bf16.msra.mxu0 %v1313
        %1765 = vmatpush.bf16.msra.mxu0 %v1309
        %1766 = vmatpush.bf16.msra.mxu0 %v1305
        %1767 = vmatpush.bf16.msra.mxu0 %v1301
        %1768 = vmatpush.bf16.msra.mxu0 %v1297
        %1769 = vmatpush.bf16.msra.mxu0 %v1293
        %1770 = vmatpush.bf16.msra.mxu0 %v1289
        %1771 = vmatpush.bf16.msra.mxu0 %v1285
        %1772 = vmatmul.bf16.gmra.mxu0 %v352
        %v1773 = vpop.f32.mrf.mxu0
        %v1774 = vadd.f32 %v1755, %v1773
        %v1775 = vpop.f32.mrf.mxu0
        %v1776 = vadd.f32 %v1757, %v1775
        %1777 = vmatmul.bf16.gmra.mxu0 %v359
        %v1778 = vpop.f32.mrf.mxu0
        %v1779 = vadd.f32 %v1760, %v1778
        %v1780 = vpop.f32.mrf.mxu0
        %v1781 = vadd.f32 %v1762, %v1780
        %1782 = vdwg.mxu0
        %1783 = vmatpush.bf16.msra.mxu0 %v1345
        %1784 = vmatpush.bf16.msra.mxu0 %v1341
        %1785 = vmatpush.bf16.msra.mxu0 %v1337
        %1786 = vmatpush.bf16.msra.mxu0 %v1333
        %1787 = vmatpush.bf16.msra.mxu0 %v1329
        %1788 = vmatpush.bf16.msra.mxu0 %v1325
        %1789 = vmatpush.bf16.msra.mxu0 %v1321
        %1790 = vmatpush.bf16.msra.mxu0 %v1317
        %1791 = vmatmul.bf16.gmra.mxu0 %v353
        %v1792 = vpop.f32.mrf.mxu0
        %v1793 = vadd.f32 %v1774, %v1792
        %v1794 = vpop.f32.mrf.mxu0
        %v1795 = vadd.f32 %v1776, %v1794
        %1796 = vmatmul.bf16.gmra.mxu0 %v360
        %v1797 = vpop.f32.mrf.mxu0
        %v1798 = vadd.f32 %v1779, %v1797
        %v1799 = vpop.f32.mrf.mxu0
        %v1800 = vadd.f32 %v1781, %v1799
        %1801 = vdwg.mxu0
        %1802 = vmatpush.bf16.msra.mxu0 0
        %1803 = vmatpush.bf16.msra.mxu0 0
        %1804 = vmatpush.bf16.msra.mxu0 0
        %1805 = vmatpush.bf16.msra.mxu0 0
        %1806 = vmatpush.bf16.msra.mxu0 0
        %1807 = vmatpush.bf16.msra.mxu0 0
        %1808 = vmatpush.bf16.msra.mxu0 0
        %1809 = vmatpush.bf16.msra.mxu0 %v1349
        %1810 = vmatmul.bf16.gmra.mxu0 %v1550
        %v1811 = vpop.f32.mrf.mxu0
        %v1812 = vadd.f32 %v1793, %v1811
        %v1813 = vpop.f32.mrf.mxu0
        %v1814 = vadd.f32 %v1795, %v1813
        %1815 = vmatmul.bf16.gmra.mxu0 %v1553
        %v1816 = vpop.f32.mrf.mxu0
        %v1817 = vadd.f32 %v1798, %v1816
        %v1818 = vpop.f32.mrf.mxu0
        %v1819 = vadd.f32 %v1800, %v1818
        %1820 = vdwg.mxu0
        %1821 = vmatpush.bf16.msra.mxu0 %v1186
        %1822 = vmatpush.bf16.msra.mxu0 %v1182
        %1823 = vmatpush.bf16.msra.mxu0 %v1178
        %1824 = vmatpush.bf16.msra.mxu0 %v1174
        %1825 = vmatpush.bf16.msra.mxu0 %v1170
        %1826 = vmatpush.bf16.msra.mxu0 %v1166
        %1827 = vmatpush.bf16.msra.mxu0 %v1162
        %1828 = vmatpush.bf16.msra.mxu0 %v1158
        %1829 = vmatmul.bf16.gmra.mxu0 %v348
        %v1830 = vpop.f32.mrf.mxu0
        %v1831 = vadd.f32 %v562, %v1830
        %v1832 = vpop.f32.mrf.mxu0
        %v1833 = vadd.f32 %v562, %v1832
        %1834 = vmatmul.bf16.gmra.mxu0 %v355
        %v1835 = vpop.f32.mrf.mxu0
        %v1836 = vadd.f32 %v562, %v1835
        %v1837 = vpop.f32.mrf.mxu0
        %v1838 = vadd.f32 %v562, %v1837
        %1839 = vdwg.mxu0
        %1840 = vmatpush.bf16.msra.mxu0 %v1218
        %1841 = vmatpush.bf16.msra.mxu0 %v1214
        %1842 = vmatpush.bf16.msra.mxu0 %v1210
        %1843 = vmatpush.bf16.msra.mxu0 %v1206
        %1844 = vmatpush.bf16.msra.mxu0 %v1202
        %1845 = vmatpush.bf16.msra.mxu0 %v1198
        %1846 = vmatpush.bf16.msra.mxu0 %v1194
        %1847 = vmatpush.bf16.msra.mxu0 %v1190
        %1848 = vmatmul.bf16.gmra.mxu0 %v349
        %v1849 = vpop.f32.mrf.mxu0
        %v1850 = vadd.f32 %v1831, %v1849
        %v1851 = vpop.f32.mrf.mxu0
        %v1852 = vadd.f32 %v1833, %v1851
        %1853 = vmatmul.bf16.gmra.mxu0 %v356
        %v1854 = vpop.f32.mrf.mxu0
        %v1855 = vadd.f32 %v1836, %v1854
        %v1856 = vpop.f32.mrf.mxu0
        %v1857 = vadd.f32 %v1838, %v1856
        %1858 = vdwg.mxu0
        %1859 = vmatpush.bf16.msra.mxu0 %v1250
        %1860 = vmatpush.bf16.msra.mxu0 %v1246
        %1861 = vmatpush.bf16.msra.mxu0 %v1242
        %1862 = vmatpush.bf16.msra.mxu0 %v1238
        %1863 = vmatpush.bf16.msra.mxu0 %v1234
        %1864 = vmatpush.bf16.msra.mxu0 %v1230
        %1865 = vmatpush.bf16.msra.mxu0 %v1226
        %1866 = vmatpush.bf16.msra.mxu0 %v1222
        %1867 = vmatmul.bf16.gmra.mxu0 %v350
        %v1868 = vpop.f32.mrf.mxu0
        %v1869 = vadd.f32 %v1850, %v1868
        %v1870 = vpop.f32.mrf.mxu0
        %v1871 = vadd.f32 %v1852, %v1870
        %1872 = vmatmul.bf16.gmra.mxu0 %v357
        %v1873 = vpop.f32.mrf.mxu0
        %v1874 = vadd.f32 %v1855, %v1873
        %v1875 = vpop.f32.mrf.mxu0
        %v1876 = vadd.f32 %v1857, %v1875
        %1877 = vdwg.mxu0
        %1878 = vmatpush.bf16.msra.mxu0 %v1282
        %1879 = vmatpush.bf16.msra.mxu0 %v1278
        %1880 = vmatpush.bf16.msra.mxu0 %v1274
        %1881 = vmatpush.bf16.msra.mxu0 %v1270
        %1882 = vmatpush.bf16.msra.mxu0 %v1266
        %1883 = vmatpush.bf16.msra.mxu0 %v1262
        %1884 = vmatpush.bf16.msra.mxu0 %v1258
        %1885 = vmatpush.bf16.msra.mxu0 %v1254
        %1886 = vmatmul.bf16.gmra.mxu0 %v351
        %v1887 = vpop.f32.mrf.mxu0
        %v1888 = vadd.f32 %v1869, %v1887
        %v1889 = vpop.f32.mrf.mxu0
        %v1890 = vadd.f32 %v1871, %v1889
        %1891 = vmatmul.bf16.gmra.mxu0 %v358
        %v1892 = vpop.f32.mrf.mxu0
        %v1893 = vadd.f32 %v1874, %v1892
        %v1894 = vpop.f32.mrf.mxu0
        %v1895 = vadd.f32 %v1876, %v1894
        %1896 = vdwg.mxu0
        %1897 = vmatpush.bf16.msra.mxu0 %v1314
        %1898 = vmatpush.bf16.msra.mxu0 %v1310
        %1899 = vmatpush.bf16.msra.mxu0 %v1306
        %1900 = vmatpush.bf16.msra.mxu0 %v1302
        %1901 = vmatpush.bf16.msra.mxu0 %v1298
        %1902 = vmatpush.bf16.msra.mxu0 %v1294
        %1903 = vmatpush.bf16.msra.mxu0 %v1290
        %1904 = vmatpush.bf16.msra.mxu0 %v1286
        %1905 = vmatmul.bf16.gmra.mxu0 %v352
        %v1906 = vpop.f32.mrf.mxu0
        %v1907 = vadd.f32 %v1888, %v1906
        %v1908 = vpop.f32.mrf.mxu0
        %v1909 = vadd.f32 %v1890, %v1908
        %1910 = vmatmul.bf16.gmra.mxu0 %v359
        %v1911 = vpop.f32.mrf.mxu0
        %v1912 = vadd.f32 %v1893, %v1911
        %v1913 = vpop.f32.mrf.mxu0
        %v1914 = vadd.f32 %v1895, %v1913
        %1915 = vdwg.mxu0
        %1916 = vmatpush.bf16.msra.mxu0 %v1346
        %1917 = vmatpush.bf16.msra.mxu0 %v1342
        %1918 = vmatpush.bf16.msra.mxu0 %v1338
        %1919 = vmatpush.bf16.msra.mxu0 %v1334
        %1920 = vmatpush.bf16.msra.mxu0 %v1330
        %1921 = vmatpush.bf16.msra.mxu0 %v1326
        %1922 = vmatpush.bf16.msra.mxu0 %v1322
        %1923 = vmatpush.bf16.msra.mxu0 %v1318
        %1924 = vmatmul.bf16.gmra.mxu0 %v353
        %v1925 = vpop.f32.mrf.mxu0
        %v1926 = vadd.f32 %v1907, %v1925
        %v1927 = vpop.f32.mrf.mxu0
        %v1928 = vadd.f32 %v1909, %v1927
        %1929 = vmatmul.bf16.gmra.mxu0 %v360
        %v1930 = vpop.f32.mrf.mxu0
        %v1931 = vadd.f32 %v1912, %v1930
        %v1932 = vpop.f32.mrf.mxu0
        %v1933 = vadd.f32 %v1914, %v1932
        %1934 = vdwg.mxu0
        %1935 = vmatpush.bf16.msra.mxu0 0
        %1936 = vmatpush.bf16.msra.mxu0 0
        %1937 = vmatpush.bf16.msra.mxu0 0
        %1938 = vmatpush.bf16.msra.mxu0 0
        %1939 = vmatpush.bf16.msra.mxu0 0
        %1940 = vmatpush.bf16.msra.mxu0 0
        %1941 = vmatpush.bf16.msra.mxu0 0
        %1942 = vmatpush.bf16.msra.mxu0 %v1350
        %1943 = vmatmul.bf16.gmra.mxu0 %v1550
        %v1944 = vpop.f32.mrf.mxu0
        %v1945 = vadd.f32 %v1926, %v1944
        %v1946 = vpop.f32.mrf.mxu0
        %v1947 = vadd.f32 %v1928, %v1946
        %1948 = vmatmul.bf16.gmra.mxu0 %v1553
        %v1949 = vpop.f32.mrf.mxu0
        %v1950 = vadd.f32 %v1931, %v1949
        %v1951 = vpop.f32.mrf.mxu0
        %v1952 = vadd.f32 %v1933, %v1951
        %1953 = vdwg.mxu0
        %1954 = vmatpush.bf16.msra.mxu0 %v1187
        %1955 = vmatpush.bf16.msra.mxu0 %v1183
        %1956 = vmatpush.bf16.msra.mxu0 %v1179
        %1957 = vmatpush.bf16.msra.mxu0 %v1175
        %1958 = vmatpush.bf16.msra.mxu0 %v1171
        %1959 = vmatpush.bf16.msra.mxu0 %v1167
        %1960 = vmatpush.bf16.msra.mxu0 %v1163
        %1961 = vmatpush.bf16.msra.mxu0 %v1159
        %1962 = vmatmul.bf16.gmra.mxu0 %v348
        %v1963 = vpop.f32.mrf.mxu0
        %v1964 = vadd.f32 %v563, %v1963
        %v1965 = vpop.f32.mrf.mxu0
        %v1966 = vadd.f32 %v563, %v1965
        %1967 = vmatmul.bf16.gmra.mxu0 %v355
        %v1968 = vpop.f32.mrf.mxu0
        %v1969 = vadd.f32 %v563, %v1968
        %v1970 = vpop.f32.mrf.mxu0
        %v1971 = vadd.f32 %v563, %v1970
        %1972 = vdwg.mxu0
        %1973 = vmatpush.bf16.msra.mxu0 %v1219
        %1974 = vmatpush.bf16.msra.mxu0 %v1215
        %1975 = vmatpush.bf16.msra.mxu0 %v1211
        %1976 = vmatpush.bf16.msra.mxu0 %v1207
        %1977 = vmatpush.bf16.msra.mxu0 %v1203
        %1978 = vmatpush.bf16.msra.mxu0 %v1199
        %1979 = vmatpush.bf16.msra.mxu0 %v1195
        %1980 = vmatpush.bf16.msra.mxu0 %v1191
        %1981 = vmatmul.bf16.gmra.mxu0 %v349
        %v1982 = vpop.f32.mrf.mxu0
        %v1983 = vadd.f32 %v1964, %v1982
        %v1984 = vpop.f32.mrf.mxu0
        %v1985 = vadd.f32 %v1966, %v1984
        %1986 = vmatmul.bf16.gmra.mxu0 %v356
        %v1987 = vpop.f32.mrf.mxu0
        %v1988 = vadd.f32 %v1969, %v1987
        %v1989 = vpop.f32.mrf.mxu0
        %v1990 = vadd.f32 %v1971, %v1989
        %1991 = vdwg.mxu0
        %1992 = vmatpush.bf16.msra.mxu0 %v1251
        %1993 = vmatpush.bf16.msra.mxu0 %v1247
        %1994 = vmatpush.bf16.msra.mxu0 %v1243
        %1995 = vmatpush.bf16.msra.mxu0 %v1239
        %1996 = vmatpush.bf16.msra.mxu0 %v1235
        %1997 = vmatpush.bf16.msra.mxu0 %v1231
        %1998 = vmatpush.bf16.msra.mxu0 %v1227
        %1999 = vmatpush.bf16.msra.mxu0 %v1223
        %2000 = vmatmul.bf16.gmra.mxu0 %v350
        %v2001 = vpop.f32.mrf.mxu0
        %v2002 = vadd.f32 %v1983, %v2001
        %v2003 = vpop.f32.mrf.mxu0
        %v2004 = vadd.f32 %v1985, %v2003
        %2005 = vmatmul.bf16.gmra.mxu0 %v357
        %v2006 = vpop.f32.mrf.mxu0
        %v2007 = vadd.f32 %v1988, %v2006
        %v2008 = vpop.f32.mrf.mxu0
        %v2009 = vadd.f32 %v1990, %v2008
        %2010 = vdwg.mxu0
        %2011 = vmatpush.bf16.msra.mxu0 %v1283
        %2012 = vmatpush.bf16.msra.mxu0 %v1279
        %2013 = vmatpush.bf16.msra.mxu0 %v1275
        %2014 = vmatpush.bf16.msra.mxu0 %v1271
        %2015 = vmatpush.bf16.msra.mxu0 %v1267
        %2016 = vmatpush.bf16.msra.mxu0 %v1263
        %2017 = vmatpush.bf16.msra.mxu0 %v1259
        %2018 = vmatpush.bf16.msra.mxu0 %v1255
        %2019 = vmatmul.bf16.gmra.mxu0 %v351
        %v2020 = vpop.f32.mrf.mxu0
        %v2021 = vadd.f32 %v2002, %v2020
        %v2022 = vpop.f32.mrf.mxu0
        %v2023 = vadd.f32 %v2004, %v2022
        %2024 = vmatmul.bf16.gmra.mxu0 %v358
        %v2025 = vpop.f32.mrf.mxu0
        %v2026 = vadd.f32 %v2007, %v2025
        %v2027 = vpop.f32.mrf.mxu0
        %v2028 = vadd.f32 %v2009, %v2027
        %2029 = vdwg.mxu0
        %2030 = vmatpush.bf16.msra.mxu0 %v1315
        %2031 = vmatpush.bf16.msra.mxu0 %v1311
        %2032 = vmatpush.bf16.msra.mxu0 %v1307
        %2033 = vmatpush.bf16.msra.mxu0 %v1303
        %2034 = vmatpush.bf16.msra.mxu0 %v1299
        %2035 = vmatpush.bf16.msra.mxu0 %v1295
        %2036 = vmatpush.bf16.msra.mxu0 %v1291
        %2037 = vmatpush.bf16.msra.mxu0 %v1287
        %2038 = vmatmul.bf16.gmra.mxu0 %v352
        %v2039 = vpop.f32.mrf.mxu0
        %v2040 = vadd.f32 %v2021, %v2039
        %v2041 = vpop.f32.mrf.mxu0
        %v2042 = vadd.f32 %v2023, %v2041
        %2043 = vmatmul.bf16.gmra.mxu0 %v359
        %v2044 = vpop.f32.mrf.mxu0
        %v2045 = vadd.f32 %v2026, %v2044
        %v2046 = vpop.f32.mrf.mxu0
        %v2047 = vadd.f32 %v2028, %v2046
        %2048 = vdwg.mxu0
        %2049 = vmatpush.bf16.msra.mxu0 %v1347
        %2050 = vmatpush.bf16.msra.mxu0 %v1343
        %2051 = vmatpush.bf16.msra.mxu0 %v1339
        %2052 = vmatpush.bf16.msra.mxu0 %v1335
        %2053 = vmatpush.bf16.msra.mxu0 %v1331
        %2054 = vmatpush.bf16.msra.mxu0 %v1327
        %2055 = vmatpush.bf16.msra.mxu0 %v1323
        %2056 = vmatpush.bf16.msra.mxu0 %v1319
        %2057 = vmatmul.bf16.gmra.mxu0 %v353
        %v2058 = vpop.f32.mrf.mxu0
        %v2059 = vadd.f32 %v2040, %v2058
        %v2060 = vpop.f32.mrf.mxu0
        %v2061 = vadd.f32 %v2042, %v2060
        %2062 = vmatmul.bf16.gmra.mxu0 %v360
        %v2063 = vpop.f32.mrf.mxu0
        %v2064 = vadd.f32 %v2045, %v2063
        %v2065 = vpop.f32.mrf.mxu0
        %v2066 = vadd.f32 %v2047, %v2065
        %2067 = vdwg.mxu0
        %2068 = vmatpush.bf16.msra.mxu0 0
        %2069 = vmatpush.bf16.msra.mxu0 0
        %2070 = vmatpush.bf16.msra.mxu0 0
        %2071 = vmatpush.bf16.msra.mxu0 0
        %2072 = vmatpush.bf16.msra.mxu0 0
        %2073 = vmatpush.bf16.msra.mxu0 0
        %2074 = vmatpush.bf16.msra.mxu0 0
        %2075 = vmatpush.bf16.msra.mxu0 %v1351
        %2076 = vmatmul.bf16.gmra.mxu0 %v1550
        %v2077 = vpop.f32.mrf.mxu0
        %v2078 = vadd.f32 %v2059, %v2077
        %v2079 = vpop.f32.mrf.mxu0
        %v2080 = vadd.f32 %v2061, %v2079
        %2081 = vmatmul.bf16.gmra.mxu0 %v1553
        %v2082 = vpop.f32.mrf.mxu0
        %v2083 = vadd.f32 %v2064, %v2082
        %v2084 = vpop.f32.mrf.mxu0
        %v2085 = vadd.f32 %v2066, %v2084
        %2086 = vdwg.mxu0
        %v2087 = vmax.f32 %v1679, 0.0
        %v2088 = vmax.f32 %v1812, 0.0
        %v2089 = vmax.f32 %v1945, 0.0
        %v2090 = vmax.f32 %v2078, 0.0
        %v2091 = vmax.f32 %v1681, 0.0
        %v2092 = vmax.f32 %v1814, 0.0
        %v2093 = vmax.f32 %v1947, 0.0
        %v2094 = vmax.f32 %v2080, 0.0
        %v2095 = vmax.f32 %v1684, 0.0
        %v2096 = vmax.f32 %v1817, 0.0
        %v2097 = vmax.f32 %v1950, 0.0
        %v2098 = vmax.f32 %v2083, 0.0
        %v2099 = vmax.f32 %v1686, 0.0
        %v2100 = vmax.f32 %v1819, 0.0
        %v2101 = vmax.f32 %v1952, 0.0
        %v2102 = vmax.f32 %v2085, 0.0
        %v2103 = vpack.c.bf16 %v2091, %v2087
        %v2104 = vpack.c.bf16 %v2092, %v2088
        %v2105 = vpack.c.bf16 %v2093, %v2089
        %v2106 = vpack.c.bf16 %v2094, %v2090
        %v2107 = vpack.c.bf16 %v2099, %v2095
        %v2108 = vpack.c.bf16 %v2100, %v2096
        %v2109 = vpack.c.bf16 %v2101, %v2097
        %v2110 = vpack.c.bf16 %v2102, %v2098
        %v2111 = vld [vmem:[%s3] sm:$0xff]
        %v2112 = vld [vmem:[%s3 + $0x8] sm:$0xff]
        %v2113 = vld [vmem:[%s3 + $0x10] sm:$0xff]
        %v2114 = vld [vmem:[%s3 + $0x18] sm:$0xff]
        %v2115 = vld [vmem:[%s3 + $0x20] sm:$0xff]
        %v2116 = vld [vmem:[%s3 + $0x28] sm:$0xff]
        %v2117 = vld [vmem:[%s3 + $0x30] sm:$0xff]
        %v2118 = vld [vmem:[%s3 + $0x38] sm:$0xff]
        %v2119 = vld [vmem:[%s3 + $0x40] sm:$0xff]
        %v2120 = vld [vmem:[%s3 + $0x48] sm:$0xff]
        %v2121 = vld [vmem:[%s3 + $0x50] sm:$0xff]
        %v2122 = vld [vmem:[%s3 + $0x58] sm:$0xff]
        %v2123 = vld [vmem:[%s3 + $0x60] sm:$0xff]
        %v2124 = vld [vmem:[%s3 + $0x68] sm:$0xff]
        %v2125 = vld [vmem:[%s3 + $0x70] sm:$0xff]
        %v2126 = vld [vmem:[%s3 + $0x78] sm:$0xff]
        %v2127 = vld [vmem:[%s3 + $0x80] sm:$0xff]
        %v2128 = vld [vmem:[%s3 + $0x88] sm:$0xff]
        %v2129 = vld [vmem:[%s3 + $0x90] sm:$0xff]
        %v2130 = vld [vmem:[%s3 + $0x98] sm:$0xff]
        %v2131 = vld [vmem:[%s3 + $0xa0] sm:$0xff]
        %v2132 = vld [vmem:[%s3 + $0xa8] sm:$0xff]
        %v2133 = vld [vmem:[%s3 + $0xb0] sm:$0xff]
        %v2134 = vld [vmem:[%s3 + $0xb8] sm:$0xff]
        %v2135 = vld [vmem:[%s3 + $0xc0] sm:$0xff]
        %v2136 = vld [vmem:[%s3 + $0xc8] sm:$0xff]
        %v2137 = vld [vmem:[%s3 + $0xd0] sm:$0xff]
        %v2138 = vld [vmem:[%s3 + $0xd8] sm:$0xff]
        %v2139 = vld [vmem:[%s3 + $0xe0] sm:$0xff]
        %v2140 = vld [vmem:[%s3 + $0xe8] sm:$0xff]
        %v2141 = vld [vmem:[%s3 + $0xf0] sm:$0xff]
        %v2142 = vld [vmem:[%s3 + $0xf8] sm:$0xff]
        %v2143 = vld [vmem:[%s3 + $0x100] sm:$0xff]
        %v2144 = vld [vmem:[%s3 + $0x108] sm:$0xff]
        %v2145 = vld [vmem:[%s3 + $0x110] sm:$0xff]
        %v2146 = vld [vmem:[%s3 + $0x118] sm:$0xff]
        %v2147 = vld [vmem:[%s3 + $0x120] sm:$0xff]
        %v2148 = vld [vmem:[%s3 + $0x128] sm:$0xff]
        %v2149 = vld [vmem:[%s3 + $0x130] sm:$0xff]
        %v2150 = vld [vmem:[%s3 + $0x138] sm:$0xff]
        %v2151 = vld [vmem:[%s3 + $0x140] sm:$0xff]
        %v2152 = vld [vmem:[%s3 + $0x148] sm:$0xff]
        %v2153 = vld [vmem:[%s3 + $0x150] sm:$0xff]
        %v2154 = vld [vmem:[%s3 + $0x158] sm:$0xff]
        %v2155 = vld [vmem:[%s3 + $0x160] sm:$0xff]
        %v2156 = vld [vmem:[%s3 + $0x168] sm:$0xff]
        %v2157 = vld [vmem:[%s3 + $0x170] sm:$0xff]
        %v2158 = vld [vmem:[%s3 + $0x178] sm:$0xff]
        %v2159 = vld [vmem:[%s3 + $0x180] sm:$0xff]
        %v2160 = vld [vmem:[%s3 + $0x188] sm:$0xff]
        %v2161 = vld [vmem:[%s3 + $0x190] sm:$0xff]
        %v2162 = vld [vmem:[%s3 + $0x198] sm:$0xff]
        %v2163 = vld [vmem:[%s3 + $0x1a0] sm:$0xff]
        %v2164 = vld [vmem:[%s3 + $0x1a8] sm:$0xff]
        %v2165 = vld [vmem:[%s3 + $0x1b0] sm:$0xff]
        %v2166 = vld [vmem:[%s3 + $0x1b8] sm:$0xff]
        %v2167 = vld [vmem:[%s3 + $0x1c0] sm:$0xff]
        %v2168 = vld [vmem:[%s3 + $0x1c8] sm:$0xff]
        %v2169 = vld [vmem:[%s3 + $0x1d0] sm:$0xff]
        %v2170 = vld [vmem:[%s3 + $0x1d8] sm:$0xff]
        %v2171 = vld [vmem:[%s3 + $0x1e0] sm:$0xff]
        %v2172 = vld [vmem:[%s3 + $0x1e8] sm:$0xff]
        %v2173 = vld [vmem:[%s3 + $0x1f0] sm:$0xff]
        %v2174 = vld [vmem:[%s3 + $0x1f8] sm:$0xff]
        %v2175 = vld [vmem:[%s3 + $0x200] sm:$0xff]
        %v2176 = vld [vmem:[%s3 + $0x208] sm:$0xff]
        %v2177 = vld [vmem:[%s3 + $0x210] sm:$0xff]
        %v2178 = vld [vmem:[%s3 + $0x218] sm:$0xff]
        %v2179 = vld [vmem:[%s3 + $0x220] sm:$0xff]
        %v2180 = vld [vmem:[%s3 + $0x228] sm:$0xff]
        %v2181 = vld [vmem:[%s3 + $0x230] sm:$0xff]
        %v2182 = vld [vmem:[%s3 + $0x238] sm:$0xff]
        %v2183 = vld [vmem:[%s3 + $0x240] sm:$0xff]
        %v2184 = vld [vmem:[%s3 + $0x248] sm:$0xff]
        %v2185 = vld [vmem:[%s3 + $0x250] sm:$0xff]
        %v2186 = vld [vmem:[%s3 + $0x258] sm:$0xff]
        %v2187 = vld [vmem:[%s3 + $0x260] sm:$0xff]
        %v2188 = vld [vmem:[%s3 + $0x268] sm:$0xff]
        %v2189 = vld [vmem:[%s3 + $0x270] sm:$0xff]
        %v2190 = vld [vmem:[%s3 + $0x278] sm:$0xff]
        %v2191 = vld [vmem:[%s3 + $0x280] sm:$0xff]
        %v2192 = vld [vmem:[%s3 + $0x288] sm:$0xff]
        %v2193 = vld [vmem:[%s3 + $0x290] sm:$0xff]
        %v2194 = vld [vmem:[%s3 + $0x298] sm:$0xff]
        %v2195 = vld [vmem:[%s3 + $0x2a0] sm:$0xff]
        %v2196 = vld [vmem:[%s3 + $0x2a8] sm:$0xff]
        %v2197 = vld [vmem:[%s3 + $0x2b0] sm:$0xff]
        %v2198 = vld [vmem:[%s3 + $0x2b8] sm:$0xff]
        %v2199 = vld [vmem:[%s3 + $0x2c0] sm:$0xff]
        %v2200 = vld [vmem:[%s3 + $0x2c8] sm:$0xff]
        %v2201 = vld [vmem:[%s3 + $0x2d0] sm:$0xff]
        %v2202 = vld [vmem:[%s3 + $0x2d8] sm:$0xff]
        %v2203 = vld [vmem:[%s3 + $0x2e0] sm:$0xff]
        %v2204 = vld [vmem:[%s3 + $0x2e8] sm:$0xff]
        %v2205 = vld [vmem:[%s3 + $0x2f0] sm:$0xff]
        %v2206 = vld [vmem:[%s3 + $0x2f8] sm:$0xff]
        %v2207 = vld [vmem:[%s3 + $0x300] sm:$0xff]
        %v2208 = vld [vmem:[%s3 + $0x308] sm:$0xff]
        %v2209 = vld [vmem:[%s3 + $0x310] sm:$0xff]
        %v2210 = vld [vmem:[%s3 + $0x318] sm:$0xff]
        %v2211 = vld [vmem:[%s3 + $0x320] sm:$0xff]
        %v2212 = vld [vmem:[%s3 + $0x328] sm:$0xff]
        %v2213 = vld [vmem:[%s3 + $0x330] sm:$0xff]
        %v2214 = vld [vmem:[%s3 + $0x338] sm:$0xff]
        %v2215 = vld [vmem:[%s3 + $0x340] sm:$0xff]
        %v2216 = vld [vmem:[%s3 + $0x348] sm:$0xff]
        %v2217 = vld [vmem:[%s3 + $0x350] sm:$0xff]
        %v2218 = vld [vmem:[%s3 + $0x358] sm:$0xff]
        %v2219 = vld [vmem:[%s3 + $0x360] sm:$0xff]
        %v2220 = vld [vmem:[%s3 + $0x368] sm:$0xff]
        %v2221 = vld [vmem:[%s3 + $0x370] sm:$0xff]
        %v2222 = vld [vmem:[%s3 + $0x378] sm:$0xff]
        %v2223 = vld [vmem:[%s3 + $0x380] sm:$0xff]
        %v2224 = vld [vmem:[%s3 + $0x388] sm:$0xff]
        %v2225 = vld [vmem:[%s3 + $0x390] sm:$0xff]
        %v2226 = vld [vmem:[%s3 + $0x398] sm:$0xff]
        %v2227 = vld [vmem:[%s3 + $0x3a0] sm:$0xff]
        %v2228 = vld [vmem:[%s3 + $0x3a8] sm:$0xff]
        %v2229 = vld [vmem:[%s3 + $0x3b0] sm:$0xff]
        %v2230 = vld [vmem:[%s3 + $0x3b8] sm:$0xff]
        %v2231 = vld [vmem:[%s3 + $0x3c0] sm:$0xff]
        %v2232 = vld [vmem:[%s3 + $0x3c8] sm:$0xff]
        %v2233 = vld [vmem:[%s3 + $0x3d0] sm:$0xff]
        %v2234 = vld [vmem:[%s3 + $0x3d8] sm:$0xff]
        %v2235 = vld [vmem:[%s3 + $0x3e0] sm:$0xff]
        %v2236 = vld [vmem:[%s3 + $0x3e8] sm:$0xff]
        %v2237 = vld [vmem:[%s3 + $0x3f0] sm:$0xff]
        %v2238 = vld [vmem:[%s3 + $0x3f8] sm:$0xff]
        %v2239 = vld [vmem:[%s4] sm:$0xf]
        %v2241 = vperm.slane %v2239, 0
        %v2242 = vperm.slane %v2239, 1
        %v2243 = vperm.slane %v2239, 2
        %v2244 = vperm.slane %v2239, 3
        %v2377 = vunpack.c.l.b16 %v2111
        %v2378 = vunpack.c.h.b16 %v2111
        %v2379 = vunpack.c.l.b16 %v2112
        %v2380 = vunpack.c.h.b16 %v2112
        %v2381 = vunpack.c.l.b16 %v2113
        %v2382 = vunpack.c.h.b16 %v2113
        %v2383 = vunpack.c.l.b16 %v2114
        %v2384 = vunpack.c.h.b16 %v2114
        %v2385 = vunpack.c.l.b16 %v2115
        %v2386 = vunpack.c.h.b16 %v2115
        %v2387 = vunpack.c.l.b16 %v2116
        %v2388 = vunpack.c.h.b16 %v2116
        %v2389 = vunpack.c.l.b16 %v2117
        %v2390 = vunpack.c.h.b16 %v2117
        %v2391 = vunpack.c.l.b16 %v2118
        %v2392 = vunpack.c.h.b16 %v2118
        %v2393 = vunpack.c.l.b16 %v2119
        %v2394 = vunpack.c.h.b16 %v2119
        %v2395 = vunpack.c.l.b16 %v2120
        %v2396 = vunpack.c.h.b16 %v2120
        %v2397 = vunpack.c.l.b16 %v2121
        %v2398 = vunpack.c.h.b16 %v2121
        %v2399 = vunpack.c.l.b16 %v2122
        %v2400 = vunpack.c.h.b16 %v2122
        %v2401 = vunpack.c.l.b16 %v2123
        %v2402 = vunpack.c.h.b16 %v2123
        %v2403 = vunpack.c.l.b16 %v2124
        %v2404 = vunpack.c.h.b16 %v2124
        %v2405 = vunpack.c.l.b16 %v2125
        %v2406 = vunpack.c.h.b16 %v2125
        %v2407 = vunpack.c.l.b16 %v2126
        %v2408 = vunpack.c.h.b16 %v2126
        %v2409 = vunpack.c.l.b16 %v2127
        %v2410 = vunpack.c.h.b16 %v2127
        %v2411 = vunpack.c.l.b16 %v2128
        %v2412 = vunpack.c.h.b16 %v2128
        %v2413 = vunpack.c.l.b16 %v2129
        %v2414 = vunpack.c.h.b16 %v2129
        %v2415 = vunpack.c.l.b16 %v2130
        %v2416 = vunpack.c.h.b16 %v2130
        %v2417 = vunpack.c.l.b16 %v2131
        %v2418 = vunpack.c.h.b16 %v2131
        %v2419 = vunpack.c.l.b16 %v2132
        %v2420 = vunpack.c.h.b16 %v2132
        %v2421 = vunpack.c.l.b16 %v2133
        %v2422 = vunpack.c.h.b16 %v2133
        %v2423 = vunpack.c.l.b16 %v2134
        %v2424 = vunpack.c.h.b16 %v2134
        %v2425 = vunpack.c.l.b16 %v2135
        %v2426 = vunpack.c.h.b16 %v2135
        %v2427 = vunpack.c.l.b16 %v2136
        %v2428 = vunpack.c.h.b16 %v2136
        %v2429 = vunpack.c.l.b16 %v2137
        %v2430 = vunpack.c.h.b16 %v2137
        %v2431 = vunpack.c.l.b16 %v2138
        %v2432 = vunpack.c.h.b16 %v2138
        %v2433 = vunpack.c.l.b16 %v2139
        %v2434 = vunpack.c.h.b16 %v2139
        %v2435 = vunpack.c.l.b16 %v2140
        %v2436 = vunpack.c.h.b16 %v2140
        %v2437 = vunpack.c.l.b16 %v2141
        %v2438 = vunpack.c.h.b16 %v2141
        %v2439 = vunpack.c.l.b16 %v2142
        %v2440 = vunpack.c.h.b16 %v2142
        %v2441 = vunpack.c.l.b16 %v2143
        %v2442 = vunpack.c.h.b16 %v2143
        %v2443 = vunpack.c.l.b16 %v2144
        %v2444 = vunpack.c.h.b16 %v2144
        %v2445 = vunpack.c.l.b16 %v2145
        %v2446 = vunpack.c.h.b16 %v2145
        %v2447 = vunpack.c.l.b16 %v2146
        %v2448 = vunpack.c.h.b16 %v2146
        %v2449 = vunpack.c.l.b16 %v2147
        %v2450 = vunpack.c.h.b16 %v2147
        %v2451 = vunpack.c.l.b16 %v2148
        %v2452 = vunpack.c.h.b16 %v2148
        %v2453 = vunpack.c.l.b16 %v2149
        %v2454 = vunpack.c.h.b16 %v2149
        %v2455 = vunpack.c.l.b16 %v2150
        %v2456 = vunpack.c.h.b16 %v2150
        %v2457 = vunpack.c.l.b16 %v2151
        %v2458 = vunpack.c.h.b16 %v2151
        %v2459 = vunpack.c.l.b16 %v2152
        %v2460 = vunpack.c.h.b16 %v2152
        %v2461 = vunpack.c.l.b16 %v2153
        %v2462 = vunpack.c.h.b16 %v2153
        %v2463 = vunpack.c.l.b16 %v2154
        %v2464 = vunpack.c.h.b16 %v2154
        %v2465 = vunpack.c.l.b16 %v2155
        %v2466 = vunpack.c.h.b16 %v2155
        %v2467 = vunpack.c.l.b16 %v2156
        %v2468 = vunpack.c.h.b16 %v2156
        %v2469 = vunpack.c.l.b16 %v2157
        %v2470 = vunpack.c.h.b16 %v2157
        %v2471 = vunpack.c.l.b16 %v2158
        %v2472 = vunpack.c.h.b16 %v2158
        %v2473 = vunpack.c.l.b16 %v2159
        %v2474 = vunpack.c.h.b16 %v2159
        %v2475 = vunpack.c.l.b16 %v2160
        %v2476 = vunpack.c.h.b16 %v2160
        %v2477 = vunpack.c.l.b16 %v2161
        %v2478 = vunpack.c.h.b16 %v2161
        %v2479 = vunpack.c.l.b16 %v2162
        %v2480 = vunpack.c.h.b16 %v2162
        %v2481 = vunpack.c.l.b16 %v2163
        %v2482 = vunpack.c.h.b16 %v2163
        %v2483 = vunpack.c.l.b16 %v2164
        %v2484 = vunpack.c.h.b16 %v2164
        %v2485 = vunpack.c.l.b16 %v2165
        %v2486 = vunpack.c.h.b16 %v2165
        %v2487 = vunpack.c.l.b16 %v2166
        %v2488 = vunpack.c.h.b16 %v2166
        %v2489 = vunpack.c.l.b16 %v2167
        %v2490 = vunpack.c.h.b16 %v2167
        %v2491 = vunpack.c.l.b16 %v2168
        %v2492 = vunpack.c.h.b16 %v2168
        %v2493 = vunpack.c.l.b16 %v2169
        %v2494 = vunpack.c.h.b16 %v2169
        %v2495 = vunpack.c.l.b16 %v2170
        %v2496 = vunpack.c.h.b16 %v2170
        %v2497 = vunpack.c.l.b16 %v2171
        %v2498 = vunpack.c.h.b16 %v2171
        %v2499 = vunpack.c.l.b16 %v2172
        %v2500 = vunpack.c.h.b16 %v2172
        %v2501 = vunpack.c.l.b16 %v2173
        %v2502 = vunpack.c.h.b16 %v2173
        %v2503 = vunpack.c.l.b16 %v2174
        %v2504 = vunpack.c.h.b16 %v2174
        %v2505 = vunpack.c.l.b16 %v2175
        %v2506 = vunpack.c.h.b16 %v2175
        %v2507 = vunpack.c.l.b16 %v2176
        %v2508 = vunpack.c.h.b16 %v2176
        %v2509 = vunpack.c.l.b16 %v2177
        %v2510 = vunpack.c.h.b16 %v2177
        %v2511 = vunpack.c.l.b16 %v2178
        %v2512 = vunpack.c.h.b16 %v2178
        %v2513 = vunpack.c.l.b16 %v2179
        %v2514 = vunpack.c.h.b16 %v2179
        %v2515 = vunpack.c.l.b16 %v2180
        %v2516 = vunpack.c.h.b16 %v2180
        %v2517 = vunpack.c.l.b16 %v2181
        %v2518 = vunpack.c.h.b16 %v2181
        %v2519 = vunpack.c.l.b16 %v2182
        %v2520 = vunpack.c.h.b16 %v2182
        %v2521 = vunpack.c.l.b16 %v2183
        %v2522 = vunpack.c.h.b16 %v2183
        %v2523 = vunpack.c.l.b16 %v2184
        %v2524 = vunpack.c.h.b16 %v2184
        %v2525 = vunpack.c.l.b16 %v2185
        %v2526 = vunpack.c.h.b16 %v2185
        %v2527 = vunpack.c.l.b16 %v2186
        %v2528 = vunpack.c.h.b16 %v2186
        %v2529 = vunpack.c.l.b16 %v2187
        %v2530 = vunpack.c.h.b16 %v2187
        %v2531 = vunpack.c.l.b16 %v2188
        %v2532 = vunpack.c.h.b16 %v2188
        %v2533 = vunpack.c.l.b16 %v2189
        %v2534 = vunpack.c.h.b16 %v2189
        %v2535 = vunpack.c.l.b16 %v2190
        %v2536 = vunpack.c.h.b16 %v2190
        %v2537 = vunpack.c.l.b16 %v2191
        %v2538 = vunpack.c.h.b16 %v2191
        %v2539 = vunpack.c.l.b16 %v2192
        %v2540 = vunpack.c.h.b16 %v2192
        %v2541 = vunpack.c.l.b16 %v2193
        %v2542 = vunpack.c.h.b16 %v2193
        %v2543 = vunpack.c.l.b16 %v2194
        %v2544 = vunpack.c.h.b16 %v2194
        %v2545 = vunpack.c.l.b16 %v2195
        %v2546 = vunpack.c.h.b16 %v2195
        %v2547 = vunpack.c.l.b16 %v2196
        %v2548 = vunpack.c.h.b16 %v2196
        %v2549 = vunpack.c.l.b16 %v2197
        %v2550 = vunpack.c.h.b16 %v2197
        %v2551 = vunpack.c.l.b16 %v2198
        %v2552 = vunpack.c.h.b16 %v2198
        %v2553 = vunpack.c.l.b16 %v2199
        %v2554 = vunpack.c.h.b16 %v2199
        %v2555 = vunpack.c.l.b16 %v2200
        %v2556 = vunpack.c.h.b16 %v2200
        %v2557 = vunpack.c.l.b16 %v2201
        %v2558 = vunpack.c.h.b16 %v2201
        %v2559 = vunpack.c.l.b16 %v2202
        %v2560 = vunpack.c.h.b16 %v2202
        %v2561 = vunpack.c.l.b16 %v2203
        %v2562 = vunpack.c.h.b16 %v2203
        %v2563 = vunpack.c.l.b16 %v2204
        %v2564 = vunpack.c.h.b16 %v2204
        %v2565 = vunpack.c.l.b16 %v2205
        %v2566 = vunpack.c.h.b16 %v2205
        %v2567 = vunpack.c.l.b16 %v2206
        %v2568 = vunpack.c.h.b16 %v2206
        %v2569 = vunpack.c.l.b16 %v2207
        %v2570 = vunpack.c.h.b16 %v2207
        %v2571 = vunpack.c.l.b16 %v2208
        %v2572 = vunpack.c.h.b16 %v2208
        %v2573 = vunpack.c.l.b16 %v2209
        %v2574 = vunpack.c.h.b16 %v2209
        %v2575 = vunpack.c.l.b16 %v2210
        %v2576 = vunpack.c.h.b16 %v2210
        %v2577 = vunpack.c.l.b16 %v2211
        %v2578 = vunpack.c.h.b16 %v2211
        %v2579 = vunpack.c.l.b16 %v2212
        %v2580 = vunpack.c.h.b16 %v2212
        %v2581 = vunpack.c.l.b16 %v2213
        %v2582 = vunpack.c.h.b16 %v2213
        %v2583 = vunpack.c.l.b16 %v2214
        %v2584 = vunpack.c.h.b16 %v2214
        %v2585 = vunpack.c.l.b16 %v2215
        %v2586 = vunpack.c.h.b16 %v2215
        %v2587 = vunpack.c.l.b16 %v2216
        %v2588 = vunpack.c.h.b16 %v2216
        %v2589 = vunpack.c.l.b16 %v2217
        %v2590 = vunpack.c.h.b16 %v2217
        %v2591 = vunpack.c.l.b16 %v2218
        %v2592 = vunpack.c.h.b16 %v2218
        %v2593 = vunpack.c.l.b16 %v2219
        %v2594 = vunpack.c.h.b16 %v2219
        %v2595 = vunpack.c.l.b16 %v2220
        %v2596 = vunpack.c.h.b16 %v2220
        %v2597 = vunpack.c.l.b16 %v2221
        %v2598 = vunpack.c.h.b16 %v2221
        %v2599 = vunpack.c.l.b16 %v2222
        %v2600 = vunpack.c.h.b16 %v2222
        %v2601 = vunpack.c.l.b16 %v2223
        %v2602 = vunpack.c.h.b16 %v2223
        %v2603 = vunpack.c.l.b16 %v2224
        %v2604 = vunpack.c.h.b16 %v2224
        %v2605 = vunpack.c.l.b16 %v2225
        %v2606 = vunpack.c.h.b16 %v2225
        %v2607 = vunpack.c.l.b16 %v2226
        %v2608 = vunpack.c.h.b16 %v2226
        %v2609 = vunpack.c.l.b16 %v2227
        %v2610 = vunpack.c.h.b16 %v2227
        %v2611 = vunpack.c.l.b16 %v2228
        %v2612 = vunpack.c.h.b16 %v2228
        %v2613 = vunpack.c.l.b16 %v2229
        %v2614 = vunpack.c.h.b16 %v2229
        %v2615 = vunpack.c.l.b16 %v2230
        %v2616 = vunpack.c.h.b16 %v2230
        %v2617 = vunpack.c.l.b16 %v2231
        %v2618 = vunpack.c.h.b16 %v2231
        %v2619 = vunpack.c.l.b16 %v2232
        %v2620 = vunpack.c.h.b16 %v2232
        %v2621 = vunpack.c.l.b16 %v2233
        %v2622 = vunpack.c.h.b16 %v2233
        %v2623 = vunpack.c.l.b16 %v2234
        %v2624 = vunpack.c.h.b16 %v2234
        %v2625 = vunpack.c.l.b16 %v2235
        %v2626 = vunpack.c.h.b16 %v2235
        %v2627 = vunpack.c.l.b16 %v2236
        %v2628 = vunpack.c.h.b16 %v2236
        %v2629 = vunpack.c.l.b16 %v2237
        %v2630 = vunpack.c.h.b16 %v2237
        %v2631 = vunpack.c.l.b16 %v2238
        %v2632 = vunpack.c.h.b16 %v2238
        %v2633 = vpack.c.b16 %v2381, %v2377
        %v2634 = vpack.c.b16 %v2382, %v2378
        %v2635 = vpack.c.b16 %v2383, %v2379
        %v2636 = vpack.c.b16 %v2384, %v2380
        %v2637 = vpack.c.b16 %v2389, %v2385
        %v2638 = vpack.c.b16 %v2390, %v2386
        %v2639 = vpack.c.b16 %v2391, %v2387
        %v2640 = vpack.c.b16 %v2392, %v2388
        %v2641 = vpack.c.b16 %v2397, %v2393
        %v2642 = vpack.c.b16 %v2398, %v2394
        %v2643 = vpack.c.b16 %v2399, %v2395
        %v2644 = vpack.c.b16 %v2400, %v2396
        %v2645 = vpack.c.b16 %v2405, %v2401
        %v2646 = vpack.c.b16 %v2406, %v2402
        %v2647 = vpack.c.b16 %v2407, %v2403
        %v2648 = vpack.c.b16 %v2408, %v2404
        %v2649 = vpack.c.b16 %v2413, %v2409
        %v2650 = vpack.c.b16 %v2414, %v2410
        %v2651 = vpack.c.b16 %v2415, %v2411
        %v2652 = vpack.c.b16 %v2416, %v2412
        %v2653 = vpack.c.b16 %v2421, %v2417
        %v2654 = vpack.c.b16 %v2422, %v2418
        %v2655 = vpack.c.b16 %v2423, %v2419
        %v2656 = vpack.c.b16 %v2424, %v2420
        %v2657 = vpack.c.b16 %v2429, %v2425
        %v2658 = vpack.c.b16 %v2430, %v2426
        %v2659 = vpack.c.b16 %v2431, %v2427
        %v2660 = vpack.c.b16 %v2432, %v2428
        %v2661 = vpack.c.b16 %v2437, %v2433
        %v2662 = vpack.c.b16 %v2438, %v2434
        %v2663 = vpack.c.b16 %v2439, %v2435
        %v2664 = vpack.c.b16 %v2440, %v2436
        %v2665 = vpack.c.b16 %v2445, %v2441
        %v2666 = vpack.c.b16 %v2446, %v2442
        %v2667 = vpack.c.b16 %v2447, %v2443
        %v2668 = vpack.c.b16 %v2448, %v2444
        %v2669 = vpack.c.b16 %v2453, %v2449
        %v2670 = vpack.c.b16 %v2454, %v2450
        %v2671 = vpack.c.b16 %v2455, %v2451
        %v2672 = vpack.c.b16 %v2456, %v2452
        %v2673 = vpack.c.b16 %v2461, %v2457
        %v2674 = vpack.c.b16 %v2462, %v2458
        %v2675 = vpack.c.b16 %v2463, %v2459
        %v2676 = vpack.c.b16 %v2464, %v2460
        %v2677 = vpack.c.b16 %v2469, %v2465
        %v2678 = vpack.c.b16 %v2470, %v2466
        %v2679 = vpack.c.b16 %v2471, %v2467
        %v2680 = vpack.c.b16 %v2472, %v2468
        %v2681 = vpack.c.b16 %v2477, %v2473
        %v2682 = vpack.c.b16 %v2478, %v2474
        %v2683 = vpack.c.b16 %v2479, %v2475
        %v2684 = vpack.c.b16 %v2480, %v2476
        %v2685 = vpack.c.b16 %v2485, %v2481
        %v2686 = vpack.c.b16 %v2486, %v2482
        %v2687 = vpack.c.b16 %v2487, %v2483
        %v2688 = vpack.c.b16 %v2488, %v2484
        %v2689 = vpack.c.b16 %v2493, %v2489
        %v2690 = vpack.c.b16 %v2494, %v2490
        %v2691 = vpack.c.b16 %v2495, %v2491
        %v2692 = vpack.c.b16 %v2496, %v2492
        %v2693 = vpack.c.b16 %v2501, %v2497
        %v2694 = vpack.c.b16 %v2502, %v2498
        %v2695 = vpack.c.b16 %v2503, %v2499
        %v2696 = vpack.c.b16 %v2504, %v2500
        %v2697 = vpack.c.b16 %v2509, %v2505
        %v2698 = vpack.c.b16 %v2510, %v2506
        %v2699 = vpack.c.b16 %v2511, %v2507
        %v2700 = vpack.c.b16 %v2512, %v2508
        %v2701 = vpack.c.b16 %v2517, %v2513
        %v2702 = vpack.c.b16 %v2518, %v2514
        %v2703 = vpack.c.b16 %v2519, %v2515
        %v2704 = vpack.c.b16 %v2520, %v2516
        %v2705 = vpack.c.b16 %v2525, %v2521
        %v2706 = vpack.c.b16 %v2526, %v2522
        %v2707 = vpack.c.b16 %v2527, %v2523
        %v2708 = vpack.c.b16 %v2528, %v2524
        %v2709 = vpack.c.b16 %v2533, %v2529
        %v2710 = vpack.c.b16 %v2534, %v2530
        %v2711 = vpack.c.b16 %v2535, %v2531
        %v2712 = vpack.c.b16 %v2536, %v2532
        %v2713 = vpack.c.b16 %v2541, %v2537
        %v2714 = vpack.c.b16 %v2542, %v2538
        %v2715 = vpack.c.b16 %v2543, %v2539
        %v2716 = vpack.c.b16 %v2544, %v2540
        %v2717 = vpack.c.b16 %v2549, %v2545
        %v2718 = vpack.c.b16 %v2550, %v2546
        %v2719 = vpack.c.b16 %v2551, %v2547
        %v2720 = vpack.c.b16 %v2552, %v2548
        %v2721 = vpack.c.b16 %v2557, %v2553
        %v2722 = vpack.c.b16 %v2558, %v2554
        %v2723 = vpack.c.b16 %v2559, %v2555
        %v2724 = vpack.c.b16 %v2560, %v2556
        %v2725 = vpack.c.b16 %v2565, %v2561
        %v2726 = vpack.c.b16 %v2566, %v2562
        %v2727 = vpack.c.b16 %v2567, %v2563
        %v2728 = vpack.c.b16 %v2568, %v2564
        %v2729 = vpack.c.b16 %v2573, %v2569
        %v2730 = vpack.c.b16 %v2574, %v2570
        %v2731 = vpack.c.b16 %v2575, %v2571
        %v2732 = vpack.c.b16 %v2576, %v2572
        %v2733 = vpack.c.b16 %v2581, %v2577
        %v2734 = vpack.c.b16 %v2582, %v2578
        %v2735 = vpack.c.b16 %v2583, %v2579
        %v2736 = vpack.c.b16 %v2584, %v2580
        %v2737 = vpack.c.b16 %v2589, %v2585
        %v2738 = vpack.c.b16 %v2590, %v2586
        %v2739 = vpack.c.b16 %v2591, %v2587
        %v2740 = vpack.c.b16 %v2592, %v2588
        %v2741 = vpack.c.b16 %v2597, %v2593
        %v2742 = vpack.c.b16 %v2598, %v2594
        %v2743 = vpack.c.b16 %v2599, %v2595
        %v2744 = vpack.c.b16 %v2600, %v2596
        %v2745 = vpack.c.b16 %v2605, %v2601
        %v2746 = vpack.c.b16 %v2606, %v2602
        %v2747 = vpack.c.b16 %v2607, %v2603
        %v2748 = vpack.c.b16 %v2608, %v2604
        %v2749 = vpack.c.b16 %v2613, %v2609
        %v2750 = vpack.c.b16 %v2614, %v2610
        %v2751 = vpack.c.b16 %v2615, %v2611
        %v2752 = vpack.c.b16 %v2616, %v2612
        %v2753 = vpack.c.b16 %v2621, %v2617
        %v2754 = vpack.c.b16 %v2622, %v2618
        %v2755 = vpack.c.b16 %v2623, %v2619
        %v2756 = vpack.c.b16 %v2624, %v2620
        %v2757 = vpack.c.b16 %v2629, %v2625
        %v2758 = vpack.c.b16 %v2630, %v2626
        %v2759 = vpack.c.b16 %v2631, %v2627
        %v2760 = vpack.c.b16 %v2632, %v2628
        %2889 = vmatpush.bf16.msra.mxu0 %v2661
        %2890 = vmatpush.bf16.msra.mxu0 %v2657
        %2891 = vmatpush.bf16.msra.mxu0 %v2653
        %2892 = vmatpush.bf16.msra.mxu0 %v2649
        %2893 = vmatpush.bf16.msra.mxu0 %v2645
        %2894 = vmatpush.bf16.msra.mxu0 %v2641
        %2895 = vmatpush.bf16.msra.mxu0 %v2637
        %2896 = vmatpush.bf16.msra.mxu0 %v2633
        %2897 = vmatmul.bf16.gmra.mxu0 %v2103
        %v2898 = vpop.f32.mrf.mxu0
        %v2899 = vadd.f32 %v2241, %v2898
        %v2900 = vpop.f32.mrf.mxu0
        %v2901 = vadd.f32 %v2241, %v2900
        %2902 = vmatmul.bf16.gmra.mxu0 %v2107
        %v2903 = vpop.f32.mrf.mxu0
        %v2904 = vadd.f32 %v2241, %v2903
        %v2905 = vpop.f32.mrf.mxu0
        %v2906 = vadd.f32 %v2241, %v2905
        %2907 = vdwg.mxu0
        %2908 = vmatpush.bf16.msra.mxu0 %v2693
        %2909 = vmatpush.bf16.msra.mxu0 %v2689
        %2910 = vmatpush.bf16.msra.mxu0 %v2685
        %2911 = vmatpush.bf16.msra.mxu0 %v2681
        %2912 = vmatpush.bf16.msra.mxu0 %v2677
        %2913 = vmatpush.bf16.msra.mxu0 %v2673
        %2914 = vmatpush.bf16.msra.mxu0 %v2669
        %2915 = vmatpush.bf16.msra.mxu0 %v2665
        %2916 = vmatmul.bf16.gmra.mxu0 %v2104
        %v2917 = vpop.f32.mrf.mxu0
        %v2918 = vadd.f32 %v2899, %v2917
        %v2919 = vpop.f32.mrf.mxu0
        %v2920 = vadd.f32 %v2901, %v2919
        %2921 = vmatmul.bf16.gmra.mxu0 %v2108
        %v2922 = vpop.f32.mrf.mxu0
        %v2923 = vadd.f32 %v2904, %v2922
        %v2924 = vpop.f32.mrf.mxu0
        %v2925 = vadd.f32 %v2906, %v2924
        %2926 = vdwg.mxu0
        %2927 = vmatpush.bf16.msra.mxu0 %v2725
        %2928 = vmatpush.bf16.msra.mxu0 %v2721
        %2929 = vmatpush.bf16.msra.mxu0 %v2717
        %2930 = vmatpush.bf16.msra.mxu0 %v2713
        %2931 = vmatpush.bf16.msra.mxu0 %v2709
        %2932 = vmatpush.bf16.msra.mxu0 %v2705
        %2933 = vmatpush.bf16.msra.mxu0 %v2701
        %2934 = vmatpush.bf16.msra.mxu0 %v2697
        %2935 = vmatmul.bf16.gmra.mxu0 %v2105
        %v2936 = vpop.f32.mrf.mxu0
        %v2937 = vadd.f32 %v2918, %v2936
        %v2938 = vpop.f32.mrf.mxu0
        %v2939 = vadd.f32 %v2920, %v2938
        %2940 = vmatmul.bf16.gmra.mxu0 %v2109
        %v2941 = vpop.f32.mrf.mxu0
        %v2942 = vadd.f32 %v2923, %v2941
        %v2943 = vpop.f32.mrf.mxu0
        %v2944 = vadd.f32 %v2925, %v2943
        %2945 = vdwg.mxu0
        %2946 = vmatpush.bf16.msra.mxu0 %v2757
        %2947 = vmatpush.bf16.msra.mxu0 %v2753
        %2948 = vmatpush.bf16.msra.mxu0 %v2749
        %2949 = vmatpush.bf16.msra.mxu0 %v2745
        %2950 = vmatpush.bf16.msra.mxu0 %v2741
        %2951 = vmatpush.bf16.msra.mxu0 %v2737
        %2952 = vmatpush.bf16.msra.mxu0 %v2733
        %2953 = vmatpush.bf16.msra.mxu0 %v2729
        %2954 = vmatmul.bf16.gmra.mxu0 %v2106
        %v2955 = vpop.f32.mrf.mxu0
        %v2956 = vadd.f32 %v2937, %v2955
        %v2957 = vpop.f32.mrf.mxu0
        %v2958 = vadd.f32 %v2939, %v2957
        %2959 = vmatmul.bf16.gmra.mxu0 %v2110
        %v2960 = vpop.f32.mrf.mxu0
        %v2961 = vadd.f32 %v2942, %v2960
        %v2962 = vpop.f32.mrf.mxu0
        %v2963 = vadd.f32 %v2944, %v2962
        %2964 = vdwg.mxu0
        %2965 = vmatpush.bf16.msra.mxu0 %v2662
        %2966 = vmatpush.bf16.msra.mxu0 %v2658
        %2967 = vmatpush.bf16.msra.mxu0 %v2654
        %2968 = vmatpush.bf16.msra.mxu0 %v2650
        %2969 = vmatpush.bf16.msra.mxu0 %v2646
        %2970 = vmatpush.bf16.msra.mxu0 %v2642
        %2971 = vmatpush.bf16.msra.mxu0 %v2638
        %2972 = vmatpush.bf16.msra.mxu0 %v2634
        %2973 = vmatmul.bf16.gmra.mxu0 %v2103
        %v2974 = vpop.f32.mrf.mxu0
        %v2975 = vadd.f32 %v2242, %v2974
        %v2976 = vpop.f32.mrf.mxu0
        %v2977 = vadd.f32 %v2242, %v2976
        %2978 = vmatmul.bf16.gmra.mxu0 %v2107
        %v2979 = vpop.f32.mrf.mxu0
        %v2980 = vadd.f32 %v2242, %v2979
        %v2981 = vpop.f32.mrf.mxu0
        %v2982 = vadd.f32 %v2242, %v2981
        %2983 = vdwg.mxu0
        %2984 = vmatpush.bf16.msra.mxu0 %v2694
        %2985 = vmatpush.bf16.msra.mxu0 %v2690
        %2986 = vmatpush.bf16.msra.mxu0 %v2686
        %2987 = vmatpush.bf16.msra.mxu0 %v2682
        %2988 = vmatpush.bf16.msra.mxu0 %v2678
        %2989 = vmatpush.bf16.msra.mxu0 %v2674
        %2990 = vmatpush.bf16.msra.mxu0 %v2670
        %2991 = vmatpush.bf16.msra.mxu0 %v2666
        %2992 = vmatmul.bf16.gmra.mxu0 %v2104
        %v2993 = vpop.f32.mrf.mxu0
        %v2994 = vadd.f32 %v2975, %v2993
        %v2995 = vpop.f32.mrf.mxu0
        %v2996 = vadd.f32 %v2977, %v2995
        %2997 = vmatmul.bf16.gmra.mxu0 %v2108
        %v2998 = vpop.f32.mrf.mxu0
        %v2999 = vadd.f32 %v2980, %v2998
        %v3000 = vpop.f32.mrf.mxu0
        %v3001 = vadd.f32 %v2982, %v3000
        %3002 = vdwg.mxu0
        %3003 = vmatpush.bf16.msra.mxu0 %v2726
        %3004 = vmatpush.bf16.msra.mxu0 %v2722
        %3005 = vmatpush.bf16.msra.mxu0 %v2718
        %3006 = vmatpush.bf16.msra.mxu0 %v2714
        %3007 = vmatpush.bf16.msra.mxu0 %v2710
        %3008 = vmatpush.bf16.msra.mxu0 %v2706
        %3009 = vmatpush.bf16.msra.mxu0 %v2702
        %3010 = vmatpush.bf16.msra.mxu0 %v2698
        %3011 = vmatmul.bf16.gmra.mxu0 %v2105
        %v3012 = vpop.f32.mrf.mxu0
        %v3013 = vadd.f32 %v2994, %v3012
        %v3014 = vpop.f32.mrf.mxu0
        %v3015 = vadd.f32 %v2996, %v3014
        %3016 = vmatmul.bf16.gmra.mxu0 %v2109
        %v3017 = vpop.f32.mrf.mxu0
        %v3018 = vadd.f32 %v2999, %v3017
        %v3019 = vpop.f32.mrf.mxu0
        %v3020 = vadd.f32 %v3001, %v3019
        %3021 = vdwg.mxu0
        %3022 = vmatpush.bf16.msra.mxu0 %v2758
        %3023 = vmatpush.bf16.msra.mxu0 %v2754
        %3024 = vmatpush.bf16.msra.mxu0 %v2750
        %3025 = vmatpush.bf16.msra.mxu0 %v2746
        %3026 = vmatpush.bf16.msra.mxu0 %v2742
        %3027 = vmatpush.bf16.msra.mxu0 %v2738
        %3028 = vmatpush.bf16.msra.mxu0 %v2734
        %3029 = vmatpush.bf16.msra.mxu0 %v2730
        %3030 = vmatmul.bf16.gmra.mxu0 %v2106
        %v3031 = vpop.f32.mrf.mxu0
        %v3032 = vadd.f32 %v3013, %v3031
        %v3033 = vpop.f32.mrf.mxu0
        %v3034 = vadd.f32 %v3015, %v3033
        %3035 = vmatmul.bf16.gmra.mxu0 %v2110
        %v3036 = vpop.f32.mrf.mxu0
        %v3037 = vadd.f32 %v3018, %v3036
        %v3038 = vpop.f32.mrf.mxu0
        %v3039 = vadd.f32 %v3020, %v3038
        %3040 = vdwg.mxu0
        %3041 = vmatpush.bf16.msra.mxu0 %v2663
        %3042 = vmatpush.bf16.msra.mxu0 %v2659
        %3043 = vmatpush.bf16.msra.mxu0 %v2655
        %3044 = vmatpush.bf16.msra.mxu0 %v2651
        %3045 = vmatpush.bf16.msra.mxu0 %v2647
        %3046 = vmatpush.bf16.msra.mxu0 %v2643
        %3047 = vmatpush.bf16.msra.mxu0 %v2639
        %3048 = vmatpush.bf16.msra.mxu0 %v2635
        %3049 = vmatmul.bf16.gmra.mxu0 %v2103
        %v3050 = vpop.f32.mrf.mxu0
        %v3051 = vadd.f32 %v2243, %v3050
        %v3052 = vpop.f32.mrf.mxu0
        %v3053 = vadd.f32 %v2243, %v3052
        %3054 = vmatmul.bf16.gmra.mxu0 %v2107
        %v3055 = vpop.f32.mrf.mxu0
        %v3056 = vadd.f32 %v2243, %v3055
        %v3057 = vpop.f32.mrf.mxu0
        %v3058 = vadd.f32 %v2243, %v3057
        %3059 = vdwg.mxu0
        %3060 = vmatpush.bf16.msra.mxu0 %v2695
        %3061 = vmatpush.bf16.msra.mxu0 %v2691
        %3062 = vmatpush.bf16.msra.mxu0 %v2687
        %3063 = vmatpush.bf16.msra.mxu0 %v2683
        %3064 = vmatpush.bf16.msra.mxu0 %v2679
        %3065 = vmatpush.bf16.msra.mxu0 %v2675
        %3066 = vmatpush.bf16.msra.mxu0 %v2671
        %3067 = vmatpush.bf16.msra.mxu0 %v2667
        %3068 = vmatmul.bf16.gmra.mxu0 %v2104
        %v3069 = vpop.f32.mrf.mxu0
        %v3070 = vadd.f32 %v3051, %v3069
        %v3071 = vpop.f32.mrf.mxu0
        %v3072 = vadd.f32 %v3053, %v3071
        %3073 = vmatmul.bf16.gmra.mxu0 %v2108
        %v3074 = vpop.f32.mrf.mxu0
        %v3075 = vadd.f32 %v3056, %v3074
        %v3076 = vpop.f32.mrf.mxu0
        %v3077 = vadd.f32 %v3058, %v3076
        %3078 = vdwg.mxu0
        %3079 = vmatpush.bf16.msra.mxu0 %v2727
        %3080 = vmatpush.bf16.msra.mxu0 %v2723
        %3081 = vmatpush.bf16.msra.mxu0 %v2719
        %3082 = vmatpush.bf16.msra.mxu0 %v2715
        %3083 = vmatpush.bf16.msra.mxu0 %v2711
        %3084 = vmatpush.bf16.msra.mxu0 %v2707
        %3085 = vmatpush.bf16.msra.mxu0 %v2703
        %3086 = vmatpush.bf16.msra.mxu0 %v2699
        %3087 = vmatmul.bf16.gmra.mxu0 %v2105
        %v3088 = vpop.f32.mrf.mxu0
        %v3089 = vadd.f32 %v3070, %v3088
        %v3090 = vpop.f32.mrf.mxu0
        %v3091 = vadd.f32 %v3072, %v3090
        %3092 = vmatmul.bf16.gmra.mxu0 %v2109
        %v3093 = vpop.f32.mrf.mxu0
        %v3094 = vadd.f32 %v3075, %v3093
        %v3095 = vpop.f32.mrf.mxu0
        %v3096 = vadd.f32 %v3077, %v3095
        %3097 = vdwg.mxu0
        %3098 = vmatpush.bf16.msra.mxu0 %v2759
        %3099 = vmatpush.bf16.msra.mxu0 %v2755
        %3100 = vmatpush.bf16.msra.mxu0 %v2751
        %3101 = vmatpush.bf16.msra.mxu0 %v2747
        %3102 = vmatpush.bf16.msra.mxu0 %v2743
        %3103 = vmatpush.bf16.msra.mxu0 %v2739
        %3104 = vmatpush.bf16.msra.mxu0 %v2735
        %3105 = vmatpush.bf16.msra.mxu0 %v2731
        %3106 = vmatmul.bf16.gmra.mxu0 %v2106
        %v3107 = vpop.f32.mrf.mxu0
        %v3108 = vadd.f32 %v3089, %v3107
        %v3109 = vpop.f32.mrf.mxu0
        %v3110 = vadd.f32 %v3091, %v3109
        %3111 = vmatmul.bf16.gmra.mxu0 %v2110
        %v3112 = vpop.f32.mrf.mxu0
        %v3113 = vadd.f32 %v3094, %v3112
        %v3114 = vpop.f32.mrf.mxu0
        %v3115 = vadd.f32 %v3096, %v3114
        %3116 = vdwg.mxu0
        %3117 = vmatpush.bf16.msra.mxu0 %v2664
        %3118 = vmatpush.bf16.msra.mxu0 %v2660
        %3119 = vmatpush.bf16.msra.mxu0 %v2656
        %3120 = vmatpush.bf16.msra.mxu0 %v2652
        %3121 = vmatpush.bf16.msra.mxu0 %v2648
        %3122 = vmatpush.bf16.msra.mxu0 %v2644
        %3123 = vmatpush.bf16.msra.mxu0 %v2640
        %3124 = vmatpush.bf16.msra.mxu0 %v2636
        %3125 = vmatmul.bf16.gmra.mxu0 %v2103
        %v3126 = vpop.f32.mrf.mxu0
        %v3127 = vadd.f32 %v2244, %v3126
        %v3128 = vpop.f32.mrf.mxu0
        %v3129 = vadd.f32 %v2244, %v3128
        %3130 = vmatmul.bf16.gmra.mxu0 %v2107
        %v3131 = vpop.f32.mrf.mxu0
        %v3132 = vadd.f32 %v2244, %v3131
        %v3133 = vpop.f32.mrf.mxu0
        %v3134 = vadd.f32 %v2244, %v3133
        %3135 = vdwg.mxu0
        %3136 = vmatpush.bf16.msra.mxu0 %v2696
        %3137 = vmatpush.bf16.msra.mxu0 %v2692
        %3138 = vmatpush.bf16.msra.mxu0 %v2688
        %3139 = vmatpush.bf16.msra.mxu0 %v2684
        %3140 = vmatpush.bf16.msra.mxu0 %v2680
        %3141 = vmatpush.bf16.msra.mxu0 %v2676
        %3142 = vmatpush.bf16.msra.mxu0 %v2672
        %3143 = vmatpush.bf16.msra.mxu0 %v2668
        %3144 = vmatmul.bf16.gmra.mxu0 %v2104
        %v3145 = vpop.f32.mrf.mxu0
        %v3146 = vadd.f32 %v3127, %v3145
        %v3147 = vpop.f32.mrf.mxu0
        %v3148 = vadd.f32 %v3129, %v3147
        %3149 = vmatmul.bf16.gmra.mxu0 %v2108
        %v3150 = vpop.f32.mrf.mxu0
        %v3151 = vadd.f32 %v3132, %v3150
        %v3152 = vpop.f32.mrf.mxu0
        %v3153 = vadd.f32 %v3134, %v3152
        %3154 = vdwg.mxu0
        %3155 = vmatpush.bf16.msra.mxu0 %v2728
        %3156 = vmatpush.bf16.msra.mxu0 %v2724
        %3157 = vmatpush.bf16.msra.mxu0 %v2720
        %3158 = vmatpush.bf16.msra.mxu0 %v2716
        %3159 = vmatpush.bf16.msra.mxu0 %v2712
        %3160 = vmatpush.bf16.msra.mxu0 %v2708
        %3161 = vmatpush.bf16.msra.mxu0 %v2704
        %3162 = vmatpush.bf16.msra.mxu0 %v2700
        %3163 = vmatmul.bf16.gmra.mxu0 %v2105
        %v3164 = vpop.f32.mrf.mxu0
        %v3165 = vadd.f32 %v3146, %v3164
        %v3166 = vpop.f32.mrf.mxu0
        %v3167 = vadd.f32 %v3148, %v3166
        %3168 = vmatmul.bf16.gmra.mxu0 %v2109
        %v3169 = vpop.f32.mrf.mxu0
        %v3170 = vadd.f32 %v3151, %v3169
        %v3171 = vpop.f32.mrf.mxu0
        %v3172 = vadd.f32 %v3153, %v3171
        %3173 = vdwg.mxu0
        %3174 = vmatpush.bf16.msra.mxu0 %v2760
        %3175 = vmatpush.bf16.msra.mxu0 %v2756
        %3176 = vmatpush.bf16.msra.mxu0 %v2752
        %3177 = vmatpush.bf16.msra.mxu0 %v2748
        %3178 = vmatpush.bf16.msra.mxu0 %v2744
        %3179 = vmatpush.bf16.msra.mxu0 %v2740
        %3180 = vmatpush.bf16.msra.mxu0 %v2736
        %3181 = vmatpush.bf16.msra.mxu0 %v2732
        %3182 = vmatmul.bf16.gmra.mxu0 %v2106
        %v3183 = vpop.f32.mrf.mxu0
        %v3184 = vadd.f32 %v3165, %v3183
        %v3185 = vpop.f32.mrf.mxu0
        %v3186 = vadd.f32 %v3167, %v3185
        %3187 = vmatmul.bf16.gmra.mxu0 %v2110
        %v3188 = vpop.f32.mrf.mxu0
        %v3189 = vadd.f32 %v3170, %v3188
        %v3190 = vpop.f32.mrf.mxu0
        %v3191 = vadd.f32 %v3172, %v3190
        %3192 = vdwg.mxu0
        %v3193 = vmax.f32 %v2956, 0.0
        %v3194 = vmax.f32 %v3032, 0.0
        %v3195 = vmax.f32 %v3108, 0.0
        %v3196 = vmax.f32 %v3184, 0.0
        %v3197 = vmax.f32 %v2958, 0.0
        %v3198 = vmax.f32 %v3034, 0.0
        %v3199 = vmax.f32 %v3110, 0.0
        %v3200 = vmax.f32 %v3186, 0.0
        %v3201 = vmax.f32 %v2961, 0.0
        %v3202 = vmax.f32 %v3037, 0.0
        %v3203 = vmax.f32 %v3113, 0.0
        %v3204 = vmax.f32 %v3189, 0.0
        %v3205 = vmax.f32 %v2963, 0.0
        %v3206 = vmax.f32 %v3039, 0.0
        %v3207 = vmax.f32 %v3115, 0.0
        %v3208 = vmax.f32 %v3191, 0.0
        %v3209 = vpack.c.bf16 %v3197, %v3193
        %v3210 = vpack.c.bf16 %v3198, %v3194
        %v3211 = vpack.c.bf16 %v3199, %v3195
        %v3212 = vpack.c.bf16 %v3200, %v3196
        %v3213 = vpack.c.bf16 %v3205, %v3201
        %v3214 = vpack.c.bf16 %v3206, %v3202
        %v3215 = vpack.c.bf16 %v3207, %v3203
        %v3216 = vpack.c.bf16 %v3208, %v3204
        %v3217 = vld [vmem:[#allocation4] sm:$0xf]
        %v3218 = vld [vmem:[#allocation4 + $0x4] sm:$0xf]
        %v3219 = vld [vmem:[#allocation4 + $0x8] sm:$0xf]
        %v3220 = vld [vmem:[#allocation4 + $0xc] sm:$0xf]
        %v3221 = vld [vmem:[#allocation4 + $0x10] sm:$0xf]
        %v3222 = vld [vmem:[#allocation4 + $0x14] sm:$0xf]
        %v3223 = vld [vmem:[#allocation4 + $0x18] sm:$0xf]
        %v3224 = vld [vmem:[#allocation4 + $0x1c] sm:$0xf]
        %v3225 = vld [vmem:[#allocation4 + $0x20] sm:$0xf]
        %v3226 = vld [vmem:[#allocation4 + $0x24] sm:$0xf]
        %v3227 = vld [vmem:[#allocation4 + $0x28] sm:$0xf]
        %v3228 = vld [vmem:[#allocation4 + $0x2c] sm:$0xf]
        %v3229 = vld [vmem:[#allocation4 + $0x30] sm:$0xf]
        %v3230 = vld [vmem:[#allocation4 + $0x34] sm:$0xf]
        %v3231 = vld [vmem:[#allocation4 + $0x38] sm:$0xf]
        %v3232 = vld [vmem:[#allocation4 + $0x3c] sm:$0xf]
        %v3233 = vld [vmem:[#allocation4 + $0x40] sm:$0xf]
        %v3234 = vld [vmem:[#allocation4 + $0x44] sm:$0xf]
        %v3235 = vld [vmem:[#allocation4 + $0x48] sm:$0xf]
        %v3236 = vld [vmem:[#allocation4 + $0x4c] sm:$0xf]
        %v3237 = vld [vmem:[#allocation4 + $0x50] sm:$0xf]
        %v3238 = vld [vmem:[#allocation4 + $0x54] sm:$0xf]
        %v3239 = vld [vmem:[#allocation4 + $0x58] sm:$0xf]
        %v3240 = vld [vmem:[#allocation4 + $0x5c] sm:$0xf]
        %v3241 = vld [vmem:[#allocation4 + $0x60] sm:$0xf]
        %v3242 = vld [vmem:[#allocation4 + $0x64] sm:$0xf]
        %v3243 = vld [vmem:[#allocation4 + $0x68] sm:$0xf]
        %v3244 = vld [vmem:[#allocation4 + $0x6c] sm:$0xf]
        %v3245 = vld [vmem:[#allocation4 + $0x70] sm:$0xf]
        %v3246 = vld [vmem:[#allocation4 + $0x74] sm:$0xf]
        %v3247 = vld [vmem:[#allocation4 + $0x78] sm:$0xf]
        %v3248 = vld [vmem:[#allocation4 + $0x7c] sm:$0xf]
        %v3249 = vld [vmem:[#allocation4 + $0x80] sm:$0xf]
        %v3250 = vld [vmem:[#allocation4 + $0x84] sm:$0xf]
        %v3251 = vld [vmem:[#allocation4 + $0x88] sm:$0xf]
        %v3252 = vld [vmem:[#allocation4 + $0x8c] sm:$0xf]
        %v3253 = vld [vmem:[#allocation4 + $0x90] sm:$0xf]
        %v3254 = vld [vmem:[#allocation4 + $0x94] sm:$0xf]
        %v3255 = vld [vmem:[#allocation4 + $0x98] sm:$0xf]
        %v3256 = vld [vmem:[#allocation4 + $0x9c] sm:$0xf]
        %v3257 = vld [vmem:[#allocation4 + $0xa0] sm:$0xf]
        %v3258 = vld [vmem:[#allocation4 + $0xa4] sm:$0xf]
        %v3259 = vld [vmem:[#allocation4 + $0xa8] sm:$0xf]
        %v3260 = vld [vmem:[#allocation4 + $0xac] sm:$0xf]
        %v3261 = vld [vmem:[#allocation4 + $0xb0] sm:$0xf]
        %v3262 = vld [vmem:[#allocation4 + $0xb4] sm:$0xf]
        %v3263 = vld [vmem:[#allocation4 + $0xb8] sm:$0xf]
        %v3264 = vld [vmem:[#allocation4 + $0xbc] sm:$0xf]
        %v3265 = vld [vmem:[#allocation4 + $0xc0] sm:$0xf]
        %v3266 = vld [vmem:[#allocation4 + $0xc4] sm:$0xf]
        %v3267 = vld [vmem:[#allocation4 + $0xc8] sm:$0xf]
        %v3268 = vld [vmem:[#allocation4 + $0xcc] sm:$0xf]
        %v3269 = vld [vmem:[#allocation4 + $0xd0] sm:$0xf]
        %v3270 = vld [vmem:[#allocation4 + $0xd4] sm:$0xf]
        %v3271 = vld [vmem:[#allocation4 + $0xd8] sm:$0xf]
        %v3272 = vld [vmem:[#allocation4 + $0xdc] sm:$0xf]
        %v3273 = vld [vmem:[#allocation4 + $0xe0] sm:$0xf]
        %v3274 = vld [vmem:[#allocation4 + $0xe4] sm:$0xf]
        %v3275 = vld [vmem:[#allocation4 + $0xe8] sm:$0xf]
        %v3276 = vld [vmem:[#allocation4 + $0xec] sm:$0xf]
        %v3277 = vld [vmem:[#allocation4 + $0xf0] sm:$0xf]
        %v3278 = vld [vmem:[#allocation4 + $0xf4] sm:$0xf]
        %v3279 = vld [vmem:[#allocation4 + $0xf8] sm:$0xf]
        %v3280 = vld [vmem:[#allocation4 + $0xfc] sm:$0xf]
        %v3281 = vld [vmem:[%s6] sm:$0x1]
        %v3283 = vperm.slane %v3281, 0
        %v3349 = vunpack.c.l.b16 %v3217
        %v3350 = vunpack.c.l.b16 %v3218
        %v3351 = vunpack.c.l.b16 %v3219
        %v3352 = vunpack.c.l.b16 %v3220
        %v3353 = vunpack.c.l.b16 %v3221
        %v3354 = vunpack.c.l.b16 %v3222
        %v3355 = vunpack.c.l.b16 %v3223
        %v3356 = vunpack.c.l.b16 %v3224
        %v3357 = vunpack.c.l.b16 %v3225
        %v3358 = vunpack.c.l.b16 %v3226
        %v3359 = vunpack.c.l.b16 %v3227
        %v3360 = vunpack.c.l.b16 %v3228
        %v3361 = vunpack.c.l.b16 %v3229
        %v3362 = vunpack.c.l.b16 %v3230
        %v3363 = vunpack.c.l.b16 %v3231
        %v3364 = vunpack.c.l.b16 %v3232
        %v3365 = vunpack.c.l.b16 %v3233
        %v3366 = vunpack.c.l.b16 %v3234
        %v3367 = vunpack.c.l.b16 %v3235
        %v3368 = vunpack.c.l.b16 %v3236
        %v3369 = vunpack.c.l.b16 %v3237
        %v3370 = vunpack.c.l.b16 %v3238
        %v3371 = vunpack.c.l.b16 %v3239
        %v3372 = vunpack.c.l.b16 %v3240
        %v3373 = vunpack.c.l.b16 %v3241
        %v3374 = vunpack.c.l.b16 %v3242
        %v3375 = vunpack.c.l.b16 %v3243
        %v3376 = vunpack.c.l.b16 %v3244
        %v3377 = vunpack.c.l.b16 %v3245
        %v3378 = vunpack.c.l.b16 %v3246
        %v3379 = vunpack.c.l.b16 %v3247
        %v3380 = vunpack.c.l.b16 %v3248
        %v3381 = vunpack.c.l.b16 %v3249
        %v3382 = vunpack.c.l.b16 %v3250
        %v3383 = vunpack.c.l.b16 %v3251
        %v3384 = vunpack.c.l.b16 %v3252
        %v3385 = vunpack.c.l.b16 %v3253
        %v3386 = vunpack.c.l.b16 %v3254
        %v3387 = vunpack.c.l.b16 %v3255
        %v3388 = vunpack.c.l.b16 %v3256
        %v3389 = vunpack.c.l.b16 %v3257
        %v3390 = vunpack.c.l.b16 %v3258
        %v3391 = vunpack.c.l.b16 %v3259
        %v3392 = vunpack.c.l.b16 %v3260
        %v3393 = vunpack.c.l.b16 %v3261
        %v3394 = vunpack.c.l.b16 %v3262
        %v3395 = vunpack.c.l.b16 %v3263
        %v3396 = vunpack.c.l.b16 %v3264
        %v3397 = vunpack.c.l.b16 %v3265
        %v3398 = vunpack.c.l.b16 %v3266
        %v3399 = vunpack.c.l.b16 %v3267
        %v3400 = vunpack.c.l.b16 %v3268
        %v3401 = vunpack.c.l.b16 %v3269
        %v3402 = vunpack.c.l.b16 %v3270
        %v3403 = vunpack.c.l.b16 %v3271
        %v3404 = vunpack.c.l.b16 %v3272
        %v3405 = vunpack.c.l.b16 %v3273
        %v3406 = vunpack.c.l.b16 %v3274
        %v3407 = vunpack.c.l.b16 %v3275
        %v3408 = vunpack.c.l.b16 %v3276
        %v3409 = vunpack.c.l.b16 %v3277
        %v3410 = vunpack.c.l.b16 %v3278
        %v3411 = vunpack.c.l.b16 %v3279
        %v3412 = vunpack.c.l.b16 %v3280
        %v3413 = vpack.c.b16 %v3350, %v3349
        %v3414 = vpack.c.b16 %v3352, %v3351
        %v3415 = vpack.c.b16 %v3354, %v3353
        %v3416 = vpack.c.b16 %v3356, %v3355
        %v3417 = vpack.c.b16 %v3358, %v3357
        %v3418 = vpack.c.b16 %v3360, %v3359
        %v3419 = vpack.c.b16 %v3362, %v3361
        %v3420 = vpack.c.b16 %v3364, %v3363
        %v3421 = vpack.c.b16 %v3366, %v3365
        %v3422 = vpack.c.b16 %v3368, %v3367
        %v3423 = vpack.c.b16 %v3370, %v3369
        %v3424 = vpack.c.b16 %v3372, %v3371
        %v3425 = vpack.c.b16 %v3374, %v3373
        %v3426 = vpack.c.b16 %v3376, %v3375
        %v3427 = vpack.c.b16 %v3378, %v3377
        %v3428 = vpack.c.b16 %v3380, %v3379
        %v3429 = vpack.c.b16 %v3382, %v3381
        %v3430 = vpack.c.b16 %v3384, %v3383
        %v3431 = vpack.c.b16 %v3386, %v3385
        %v3432 = vpack.c.b16 %v3388, %v3387
        %v3433 = vpack.c.b16 %v3390, %v3389
        %v3434 = vpack.c.b16 %v3392, %v3391
        %v3435 = vpack.c.b16 %v3394, %v3393
        %v3436 = vpack.c.b16 %v3396, %v3395
        %v3437 = vpack.c.b16 %v3398, %v3397
        %v3438 = vpack.c.b16 %v3400, %v3399
        %v3439 = vpack.c.b16 %v3402, %v3401
        %v3440 = vpack.c.b16 %v3404, %v3403
        %v3441 = vpack.c.b16 %v3406, %v3405
        %v3442 = vpack.c.b16 %v3408, %v3407
        %v3443 = vpack.c.b16 %v3410, %v3409
        %v3444 = vpack.c.b16 %v3412, %v3411
        %3477 = vmatpush.bf16.msra.mxu0 %v3420
        %3478 = vmatpush.bf16.msra.mxu0 %v3419
        %3479 = vmatpush.bf16.msra.mxu0 %v3418
        %3480 = vmatpush.bf16.msra.mxu0 %v3417
        %3481 = vmatpush.bf16.msra.mxu0 %v3416
        %3482 = vmatpush.bf16.msra.mxu0 %v3415
        %3483 = vmatpush.bf16.msra.mxu0 %v3414
        %3484 = vmatpush.bf16.msra.mxu0 %v3413
        %3485 = vmatmul.bf16.gmra.mxu0 %v3209
        %v3486 = vpop.f32.mrf.mxu0
        %v3487 = vadd.f32 %v3283, %v3486
        %v3488 = vpop.f32.mrf.mxu0
        %v3489 = vadd.f32 %v3283, %v3488
        %3490 = vmatmul.bf16.gmra.mxu0 %v3213
        %v3491 = vpop.f32.mrf.mxu0
        %v3492 = vadd.f32 %v3283, %v3491
        %v3493 = vpop.f32.mrf.mxu0
        %v3494 = vadd.f32 %v3283, %v3493
        %3495 = vdwg.mxu0
        %3496 = vmatpush.bf16.msra.mxu0 %v3428
        %3497 = vmatpush.bf16.msra.mxu0 %v3427
        %3498 = vmatpush.bf16.msra.mxu0 %v3426
        %3499 = vmatpush.bf16.msra.mxu0 %v3425
        %3500 = vmatpush.bf16.msra.mxu0 %v3424
        %3501 = vmatpush.bf16.msra.mxu0 %v3423
        %3502 = vmatpush.bf16.msra.mxu0 %v3422
        %3503 = vmatpush.bf16.msra.mxu0 %v3421
        %3504 = vmatmul.bf16.gmra.mxu0 %v3210
        %v3505 = vpop.f32.mrf.mxu0
        %v3506 = vadd.f32 %v3487, %v3505
        %v3507 = vpop.f32.mrf.mxu0
        %v3508 = vadd.f32 %v3489, %v3507
        %3509 = vmatmul.bf16.gmra.mxu0 %v3214
        %v3510 = vpop.f32.mrf.mxu0
        %v3511 = vadd.f32 %v3492, %v3510
        %v3512 = vpop.f32.mrf.mxu0
        %v3513 = vadd.f32 %v3494, %v3512
        %3514 = vdwg.mxu0
        %3515 = vmatpush.bf16.msra.mxu0 %v3436
        %3516 = vmatpush.bf16.msra.mxu0 %v3435
        %3517 = vmatpush.bf16.msra.mxu0 %v3434
        %3518 = vmatpush.bf16.msra.mxu0 %v3433
        %3519 = vmatpush.bf16.msra.mxu0 %v3432
        %3520 = vmatpush.bf16.msra.mxu0 %v3431
        %3521 = vmatpush.bf16.msra.mxu0 %v3430
        %3522 = vmatpush.bf16.msra.mxu0 %v3429
        %3523 = vmatmul.bf16.gmra.mxu0 %v3211
        %v3524 = vpop.f32.mrf.mxu0
        %v3525 = vadd.f32 %v3506, %v3524
        %v3526 = vpop.f32.mrf.mxu0
        %v3527 = vadd.f32 %v3508, %v3526
        %3528 = vmatmul.bf16.gmra.mxu0 %v3215
        %v3529 = vpop.f32.mrf.mxu0
        %v3530 = vadd.f32 %v3511, %v3529
        %v3531 = vpop.f32.mrf.mxu0
        %v3532 = vadd.f32 %v3513, %v3531
        %3533 = vdwg.mxu0
        %3534 = vmatpush.bf16.msra.mxu0 %v3444
        %3535 = vmatpush.bf16.msra.mxu0 %v3443
        %3536 = vmatpush.bf16.msra.mxu0 %v3442
        %3537 = vmatpush.bf16.msra.mxu0 %v3441
        %3538 = vmatpush.bf16.msra.mxu0 %v3440
        %3539 = vmatpush.bf16.msra.mxu0 %v3439
        %3540 = vmatpush.bf16.msra.mxu0 %v3438
        %3541 = vmatpush.bf16.msra.mxu0 %v3437
        %3542 = vmatmul.bf16.gmra.mxu0 %v3212
        %v3543 = vpop.f32.mrf.mxu0
        %v3544 = vadd.f32 %v3525, %v3543
        %v3545 = vpop.f32.mrf.mxu0
        %v3546 = vadd.f32 %v3527, %v3545
        %3547 = vmatmul.bf16.gmra.mxu0 %v3216
        %v3548 = vpop.f32.mrf.mxu0
        %v3549 = vadd.f32 %v3530, %v3548
        %v3550 = vpop.f32.mrf.mxu0
        %v3551 = vadd.f32 %v3532, %v3550
        %3552 = vdwg.mxu0
        %3553 = vst [vmem:[%s317] sm:$0xff] %v3544
        %3554 = vst [vmem:[%s317 + $0x8] sm:$0xff] %v3546
        %3555 = vst [vmem:[%s317 + $0x10] sm:$0xff] %v3549
        %3556 = vst [vmem:[%s317 + $0x18] sm:$0xff] %v3551
        %s3557 = smul.u32 4, %s20
        %p3558 = scmp.lt.s32.totalorder %s3557, 7
        %s3559 = scalar_select %p3558, %s3557, 7
        %s3560 = smul.addr %s3559, 8
        %s3561 = scalar_lea.vmem %s7, %s3560
        // Predicated region
        $region57: #{neural_network_forward.1} parent=47 // pred_check
          %p3562 = pneg %p190
        $region58: #{neural_network_forward.1} parent=47 // pred_check_branch
          %3564 = sbr.rel (%p3562) target = $region60
        $region59: #{neural_network_forward.1} parent=47 // pred_region
          %s3565 = smul.u32 4, %s20
        $region60: #{neural_network_forward.1} parent=47 // pred_fallthru
          _
      $region48: #{neural_network_forward.1} parent=5 // pred_fallthru
        _
      %p3566 = scmp.le.s32.totalorder 2, %s15
      // Predicated region
      $region61: #{neural_network_forward.1} parent=5 // pred_check
        %p3567 = pneg %p3566
      $region62: #{neural_network_forward.1} parent=5 // pred_check_branch
        %3569 = sbr.rel (%p3567) target = $region64
      $region63: #{neural_network_forward.1} parent=5 // pred_region
        %s3570 = ssub.s32 %s15, 2
        // Predicated region
        $region65: #{neural_network_forward.1} parent=63 // pred_check
          %p3571 = pneg %p196
        $region66: #{neural_network_forward.1} parent=63 // pred_check_branch
          %3573 = sbr.rel (%p3571) target = $region68
        $region67: #{neural_network_forward.1} parent=63 // pred_region
          %s3574 = smul.u32 4, %s21
          %p3575 = scmp.lt.s32.totalorder %s3574, 7
          %s3576 = scalar_select %p3575, %s3574, 7
          %s3577 = smul.addr %s3576, 8
          %s3578 = scalar_lea.vmem %s7, %s3577
        $region68: #{neural_network_forward.1} parent=63 // pred_fallthru
          _
      $region64: #{neural_network_forward.1} parent=5 // pred_fallthru
        _
    $region6: #{neural_network_forward.1} parent=1 // loop_footer
      %s19 = sadd.s32 1, %s15
    $region7: #{neural_network_forward.1} parent=1 // loop_footer_branch
      %14 = sbr.rel target = $region3
    $region8: #{neural_network_forward.1} parent=1 // loop_exit
      _
    %3579 = vsyncpa [#allocation3], 1
    %s3580 = scalar_lea.sflag [#allocation3], 1
    %3581 = vsyncpa %s3580, 1
    %3582 = vsyncpa [#allocation5], 1

</llo_original>
